<compile_context>
chip_gen: v7x
topology: tpu7x:2x2x1
jax: 0.10.0
libtpu: 0.0.40
codegen_flags: <defaults>
</compile_context>

<pallas_src>
import math
import functools

import jax
import jax.numpy as jnp
from jax.experimental import pallas as pl
from jax.experimental.pallas import tpu as pltpu


# ----------------------------------------------------------------------------
# Device introspection (host side, cached)
# ----------------------------------------------------------------------------
@functools.lru_cache(maxsize=None)
def _device_kind():
    try:
        return jax.devices()[0].device_kind.lower()
    except Exception:
        return ""


@functools.lru_cache(maxsize=None)
def _vmem_capacity_bytes():
    try:
        cap = getattr(pltpu.get_tpu_info(), "vmem_capacity_bytes", None)
        if cap:
            return int(cap)
    except Exception:
        pass
    kind = _device_kind()
    if "7x" in kind or "v7" in kind:
        return 64 * 1024 * 1024          # v7x: 64 MiB per TensorCore
    return 128 * 1024 * 1024             # v5e / v6e


@functools.lru_cache(maxsize=None)
def _bf16_transcendentals_ok():
    # v6e / v7x have a bf16 EUP; v5e (and older) do not -> keep f32 there.
    kind = _device_kind()
    return any(tag in kind for tag in ("v6", "v7", "7x"))


# ----------------------------------------------------------------------------
# In-kernel helpers
# ----------------------------------------------------------------------------
def _gelu(x):
    # tanh-approximate GELU (EUP-friendly)
    return 0.5 * x * (1.0 + jnp.tanh(0.7978845608028654 * (x + 0.044715 * x * x * x)))


def _layernorm(x, g, b, eps=1e-12):
    mu = jnp.mean(x, axis=-1, keepdims=True)
    xc = x - mu
    var = jnp.mean(xc * xc, axis=-1, keepdims=True)
    return xc * jax.lax.rsqrt(var + eps) * g + b


# ----------------------------------------------------------------------------
# CrossLayer kernel: one transformer cross-layer, grid = (batch, query tiles)
# ----------------------------------------------------------------------------
def cross_layer_kernel(
    x_ref, m_ref, ccls_ref,
    wq_ref, bq_ref, wkv_ref, bkv_ref, wo_ref, bo_ref,
    g1_ref, be1_ref, w1_ref, b1_ref, w2_ref, b2_ref, g2_ref, be2_ref,
    out_ref,
    k_scr, v_scr,
    *, n_head, tq, gelu_bf16,
):
    qi = pl.program_id(1)
    L = x_ref.shape[1]
    D = x_ref.shape[2]
    hd = D // n_head

    # ---- K/V for the whole sequence, head-major, once per batch element -----
    @pl.when(qi == 0)
    def _():
        x_all = x_ref[0]                                                   # (L, D) bf16
        kv = (jnp.dot(x_all, wkv_ref[...], preferred_element_type=jnp.float32)
              + bkv_ref[...]).astype(jnp.bfloat16)                         # (L, 2D)
        for h in range(n_head):                                            # static; amortized
            k_scr[h] = kv[:, h * hd:(h + 1) * hd]                          # (L, hd)
            v_scr[h] = kv[:, D + h * hd:D + (h + 1) * hd]                  # (L, hd)

    # ---- Q for this query tile (1/sqrt(hd) pre-folded into wq/bq) -----------
    row0 = pl.multiple_of(qi * tq, tq)
    xq = x_ref[0, pl.ds(row0, tq), :]                                      # (tq, D) bf16
    xq_f32 = xq.astype(jnp.float32)
    q = jnp.dot(xq, wq_ref[...], preferred_element_type=jnp.float32) + bq_ref[...]

    # cross-CLS injection hits only global row 1, i.e. only query tile 0.
    def _inject(q_in):
        q_cross = (jnp.dot(ccls_ref[0], wq_ref[...],
                           preferred_element_type=jnp.float32) + bq_ref[...])   # (1, D)
        row = jax.lax.broadcasted_iota(jnp.int32, (tq, 1), 0)
        return jnp.where(row == 1, q_cross, q_in)

    q = jax.lax.cond(qi == 0, _inject, lambda t: t, q)
    q = q.astype(jnp.bfloat16)

    mask = m_ref[0]                                                        # (1, L) f32

    # ---- Attention: heads unrolled, K/V already head-major -----------------
    # s_h = q_h k_h^T + mask ; softmax ; ctx_h = p_h v_h ; attn += ctx_h Wo_h
    nt_dims = (((1,), (1,)), ((), ()))          # contract last dims (NT matmul)
    attn = jnp.zeros((tq, D), jnp.float32)
    for h in range(n_head):
        q_h = q[:, h * hd:(h + 1) * hd]                                    # (tq, hd)
        s = jax.lax.dot_general(q_h, k_scr[h], nt_dims,
                                preferred_element_type=jnp.float32)        # (tq, L)
        s = s + mask
        s = s - jnp.max(s, axis=-1, keepdims=True)
        p = jnp.exp(s)
        p = p * pl.reciprocal(jnp.sum(p, axis=-1, keepdims=True), approx=True)
        ctx_h = jnp.dot(p.astype(jnp.bfloat16), v_scr[h],
                        preferred_element_type=jnp.float32)                # (tq, hd)
        attn = attn + jnp.dot(ctx_h.astype(jnp.bfloat16), wo_ref[h],
                              preferred_element_type=jnp.float32)          # (tq, D)
    attn = attn + bo_ref[...]

    # ---- Attention output: residual + LayerNorm (f32 math) ------------------
    h1 = _layernorm(xq_f32 + attn, g1_ref[...], be1_ref[...])

    # ---- FFN: gelu(gelu(W1 x + b1)) as written in CrossLayer.forward --------
    f = jnp.dot(h1.astype(jnp.bfloat16), w1_ref[...],
                preferred_element_type=jnp.float32) + b1_ref[...]
    if gelu_bf16:
        f = _gelu(_gelu(f.astype(jnp.bfloat16)))                           # bf16 EUP (v6e/v7x)
    else:
        f = _gelu(_gelu(f))                                                # f32 EUP (v5e)
    f = jnp.dot(f.astype(jnp.bfloat16), w2_ref[...],
                preferred_element_type=jnp.float32) + b2_ref[...]

    out_ref[0] = _layernorm(h1 + f, g2_ref[...], be2_ref[...]).astype(out_ref.dtype)


_LAYER_PARAM_NAMES = (
    "wq", "bq", "wkv", "bkv", "wo", "bo",
    "g1", "be1", "w1", "b1", "w2", "b2", "g2", "be2",
)


def _pick_tq(L):
    # Cap the query tile at 128 on small-VMEM parts (v7x: 64 MiB/TC);
    # 256 is fine on v5e/v6e (128 MiB VMEM).
    max_tq = 256 if _vmem_capacity_bytes() >= 100 * 1024 * 1024 else 128
    for cand in (256, 128, 64, 32, 16, 8):
        if cand <= max_tq and L % cand == 0:
            return cand
    return L


def _vmem_limit_bytes(L, tq, D, I, n_head):
    """Scoped-VMEM budget derived from actual tile sizes, clamped to HW."""
    del n_head
    f32, bf16 = 4, 2
    weights = (4 * D * D + 2 * D * I) * bf16 + (9 * D + I) * f32       # single-buffered
    blocks = 2 * (L * D + tq * D) * bf16 + 2 * (L + D) * f32           # double-buffered acts
    scratch = 2 * L * D * bf16                                         # head-major K/V
    temps = (3 * tq * L + 2 * tq * I + 8 * tq * D + 4 * L * D) * f32
    est = int(1.4 * (weights + blocks + scratch + temps))
    cap = _vmem_capacity_bytes()
    return max(min(est, cap - 8 * 1024 * 1024), 16 * 1024 * 1024)


def cross_layer(x, mask_add, cross_cls, p, *, n_head):
    """x: (B,L,D) bf16, mask_add: (B,L) f32 additive mask, cross_cls: (B,D) bf16."""
    B, L, D = x.shape
    hd = D // n_head
    weights = [p[n] for n in _LAYER_PARAM_NAMES]
    I = p["w1"].shape[1]
    tq = _pick_tq(L)
    n_qt = L // tq
    assert tq >= 2, "cross-CLS injection assumes row index 1 lies in query tile 0"

    act_specs = [
        pl.BlockSpec((1, L, D), lambda b, qt: (b, 0, 0)),   # full sequence (for K/V)
        pl.BlockSpec((1, 1, L), lambda b, qt: (b, 0, 0)),   # additive mask
        pl.BlockSpec((1, 1, D), lambda b, qt: (b, 0, 0)),   # cross CLS vector
    ]
    # Weights: whole-array VMEM residents -> one buffer, no per-step DMA.
    weight_specs = [pl.BlockSpec(memory_space=pltpu.MemorySpace.VMEM) for _ in weights]

    return pl.pallas_call(
        functools.partial(cross_layer_kernel, n_head=n_head, tq=tq,
                          gelu_bf16=_bf16_transcendentals_ok()),
        out_shape=jax.ShapeDtypeStruct((B, L, D), jnp.bfloat16),
        grid=(B, n_qt),
        in_specs=act_specs + weight_specs,
        out_specs=pl.BlockSpec((1, tq, D), lambda b, qt: (b, qt, 0)),
        scratch_shapes=[pltpu.VMEM((n_head, L, hd), jnp.bfloat16),   # K (head-major)
                        pltpu.VMEM((n_head, L, hd), jnp.bfloat16)],  # V (head-major)
        compiler_params=pltpu.CompilerParams(
            dimension_semantics=("parallel", "arbitrary"),
            vmem_limit_bytes=_vmem_limit_bytes(L, tq, D, I, n_head)),
    )(x, mask_add.reshape(B, 1, L), cross_cls.reshape(B, 1, D), *weights)


# ----------------------------------------------------------------------------
# Classifier kernel: Linear -> ReLU -> Linear (dropout p=0 is a no-op)
# ----------------------------------------------------------------------------
def classifier_kernel(f_ref, w1_ref, b1_ref, w2_ref, b2_ref, o_ref):
    f = f_ref[...].astype(jnp.float32)
    h = jnp.dot(f, w1_ref[...], preferred_element_type=jnp.float32) + b1_ref[...]
    h = jnp.maximum(h, 0.0)
    o = jnp.dot(h, w2_ref[...], preferred_element_type=jnp.float32) + b2_ref[...]
    o_ref[...] = o.astype(o_ref.dtype)


def classifier(feat, w1, b1, w2, b2):
    B = feat.shape[0]
    num_labels = w2.shape[1]
    return pl.pallas_call(
        classifier_kernel,
        out_shape=jax.ShapeDtypeStruct((B, num_labels), jnp.float32),
    )(feat, w1, b1, w2, b2)


# ----------------------------------------------------------------------------
# Parameter init (deterministic, synthetic — no checkpoint loading).
# Weights are stored pre-transposed to (in_features, out_features); host-side
# prep folds 1/sqrt(head_dim) into the Q projection, fuses K/V into one
# (D, 2D) matmul and stores the attention output weight head-major (H, hd, D).
# ----------------------------------------------------------------------------
def init_params(key, *, D, H, I, num_layers, vocab_t, vocab_c, max_pos,
                num_code_types, num_labels):
    keys = iter(jax.random.split(key, 1024))
    hd = D // H
    q_scale = 1.0 / math.sqrt(hd)

    def nrm(shape, scale=0.02, dtype=jnp.float32):
        return (scale * jax.random.normal(next(keys), shape, jnp.float32)).astype(dtype)

    def linear(in_d, out_d, w_dtype=jnp.bfloat16):
        return nrm((in_d, out_d), dtype=w_dtype), nrm((1, out_d))

    def layer():
        wq, bq = linear(D, D, w_dtype=jnp.float32)
        wk, bk = linear(D, D)
        wv, bv = linear(D, D)
        wo, bo = linear(D, D)
        w1, b1 = linear(D, I)
        w2, b2 = linear(I, D)
        return dict(
            # 1/sqrt(head_dim) folded into the Q projection (weight + bias)
            wq=(wq * q_scale).astype(jnp.bfloat16), bq=bq * q_scale,
            # fused K/V projection: one (D, 2D) matmul, cols [0:D)=K, [D:2D)=V
            wkv=jnp.concatenate([wk, wv], axis=1),
            bkv=jnp.concatenate([bk, bv], axis=1),
            # attention output projection stored head-major: (H, hd, D)
            wo=wo.reshape(H, hd, D), bo=bo,
            g1=jnp.ones((1, D), jnp.float32), be1=jnp.zeros((1, D), jnp.float32),
            w1=w1, b1=b1, w2=w2, b2=b2,
            g2=jnp.ones((1, D), jnp.float32), be2=jnp.zeros((1, D), jnp.float32),
        )

    params = dict(
        text_word_emb=nrm((vocab_t, D)),
        text_pos_emb=nrm((max_pos, D)),
        code_word_emb=nrm((vocab_c, D)),
        code_pos_emb=nrm((max_pos, D)),
        type_emb=nrm((num_code_types, D)),
        text_layers=[layer() for _ in range(num_layers)],
        code_layers=[layer() for _ in range(num_layers)],
    )
    cls_w1, cls_b1 = linear(2 * D + 4, D, w_dtype=jnp.float32)
    cls_w2, cls_b2 = linear(D, num_labels, w_dtype=jnp.float32)
    params.update(cls_w1=cls_w1, cls_b1=cls_b1, cls_w2=cls_w2, cls_b2=cls_b2)
    return params


# ----------------------------------------------------------------------------
# CBERT forward (glue in JAX, hot path in Pallas)
# ----------------------------------------------------------------------------
def cbert_forward(params, text_ids, text_mask, code_ids, code_type_ids,
                  code_mask, explicit_feat, *, n_head):
    B, Lt = text_ids.shape
    _, Lc = code_ids.shape

    # Embeddings (gather glue in plain JAX)
    t_hid = params["text_word_emb"][text_ids] + params["text_pos_emb"][:Lt][None, :, :]
    c_hid = (params["code_word_emb"][code_ids]
             + params["code_pos_emb"][:Lc][None, :, :]
             + params["type_emb"][code_type_ids])

    cls_vec = params["text_word_emb"][0]
    t_hid = t_hid.at[:, :2, :].set(cls_vec)
    c_hid = c_hid.at[:, :2, :].set(cls_vec)

    # Inter-layer hidden states carried in bf16 (halves HBM traffic per layer).
    t_hid = t_hid.astype(jnp.bfloat16)
    c_hid = c_hid.astype(jnp.bfloat16)

    # BERT extended attention mask: (1 - mask) * -10000, added to logits
    t_mask_add = (1.0 - text_mask.astype(jnp.float32)) * -10000.0
    c_mask_add = (1.0 - code_mask.astype(jnp.float32)) * -10000.0

    # Interleaved cross layers (text layer uses code CLS, code layer uses the
    # freshly updated text CLS).
    # TODO(synk): cross-pallas_call weight-prefetch futures (P10) for v5e.
    for tlp, clp in zip(params["text_layers"], params["code_layers"]):
        t_hid = cross_layer(t_hid, t_mask_add, c_hid[:, 0, :], tlp, n_head=n_head)
        c_hid = cross_layer(c_hid, c_mask_add, t_hid[:, 0, :], clp, n_head=n_head)

    feat = jnp.concatenate(
        [t_hid[:, 0, :].astype(jnp.float32),
         c_hid[:, 0, :].astype(jnp.float32),
         explicit_feat.astype(jnp.float32)], axis=-1)
    logits = classifier(feat, params["cls_w1"], params["cls_b1"],
                        params["cls_w2"], params["cls_b2"])
    return logits


# ----------------------------------------------------------------------------
if __name__ == "__main__":
    B, Lt, Lc = 2, 8, 8
    D, H, I = 32, 4, 64
    NUM_LAYERS = 2
    NUM_LABELS = 3
    VOCAB_T, VOCAB_C = 50, 60
    NUM_CODE_TYPES = 20
    MAX_POS = 16

    root = jax.random.PRNGKey(0)
    k_par, k_tid, k_cid, k_typ, k_feat = jax.random.split(root, 5)

    params = init_params(
        k_par, D=D, H=H, I=I, num_layers=NUM_LAYERS,
        vocab_t=VOCAB_T, vocab_c=VOCAB_C, max_pos=MAX_POS,
        num_code_types=NUM_CODE_TYPES, num_labels=NUM_LABELS)

    text_ids = jax.random.randint(k_tid, (B, Lt), 0, VOCAB_T)
    code_ids = jax.random.randint(k_cid, (B, Lc), 0, VOCAB_C)
    code_type_ids = jax.random.randint(k_typ, (B, Lc), 0, NUM_CODE_TYPES)
    explicit_feat = jax.random.normal(k_feat, (B, 4), jnp.float32)

    text_mask = jnp.ones((B, Lt), jnp.float32).at[1, -2:].set(0.0)
    code_mask = jnp.ones((B, Lc), jnp.float32).at[0, -1:].set(0.0)

    logits = cbert_forward(params, text_ids, text_mask, code_ids,
                           code_type_ids, code_mask, explicit_feat, n_head=H)
    logits = jax.block_until_ready(logits)

    assert logits.shape == (B, NUM_LABELS), logits.shape
    assert bool(jnp.all(jnp.isfinite(logits)))
    print("KERNEL_OK")
</pallas_src>

<mosaic_0001>
module attributes {stable_mosaic.version = 11 : i64} {
  func.func @cross_layer_kernel(%arg0: i32, %arg1: i32, %arg2: memref<1x8x32xbf16, #tpu.memory_space<vmem>>, %arg3: memref<1x1x8xf32, #tpu.memory_space<vmem>>, %arg4: memref<1x1x32xbf16, #tpu.memory_space<vmem>>, %arg5: memref<32x32xbf16, #tpu.memory_space<vmem>>, %arg6: memref<1x32xf32, #tpu.memory_space<vmem>>, %arg7: memref<32x64xbf16, #tpu.memory_space<vmem>>, %arg8: memref<1x64xf32, #tpu.memory_space<vmem>>, %arg9: memref<4x8x32xbf16, #tpu.memory_space<vmem>>, %arg10: memref<1x32xf32, #tpu.memory_space<vmem>>, %arg11: memref<1x32xf32, #tpu.memory_space<vmem>>, %arg12: memref<1x32xf32, #tpu.memory_space<vmem>>, %arg13: memref<32x64xbf16, #tpu.memory_space<vmem>>, %arg14: memref<1x64xf32, #tpu.memory_space<vmem>>, %arg15: memref<64x32xbf16, #tpu.memory_space<vmem>>, %arg16: memref<1x32xf32, #tpu.memory_space<vmem>>, %arg17: memref<1x32xf32, #tpu.memory_space<vmem>>, %arg18: memref<1x32xf32, #tpu.memory_space<vmem>>, %arg19: memref<1x8x32xbf16, #tpu.memory_space<vmem>>, %arg20: memref<4x8x8xbf16, #tpu.memory_space<vmem>>, %arg21: memref<4x8x8xbf16, #tpu.memory_space<vmem>>) attributes {dimension_semantics = [#tpu.dimension_semantics<parallel>, #tpu.dimension_semantics<arbitrary>], iteration_bounds = array<i64: 2, 1>, scalar_prefetch = 0 : i64, scratch_operands = 2 : i64, tpu.core_type = #tpu.core_type<tc>, window_params = [{transform_indices = @transform_0, window_bounds = array<i64: 1, 8, 32>}, {transform_indices = @transform_1, window_bounds = array<i64: 1, 1, 8>}, {transform_indices = @transform_2, window_bounds = array<i64: 1, 1, 32>}, {pipeline_mode = #tpu.pipeline_mode<synchronous>, transform_indices = @transform_3, window_bounds = array<i64: 32, 32>}, {pipeline_mode = #tpu.pipeline_mode<synchronous>, transform_indices = @transform_4, window_bounds = array<i64: 1, 32>}, {pipeline_mode = #tpu.pipeline_mode<synchronous>, transform_indices = @transform_5, window_bounds = array<i64: 32, 64>}, {pipeline_mode = #tpu.pipeline_mode<synchronous>, transform_indices = @transform_6, window_bounds = array<i64: 1, 64>}, {pipeline_mode = #tpu.pipeline_mode<synchronous>, transform_indices = @transform_7, window_bounds = array<i64: 4, 8, 32>}, {pipeline_mode = #tpu.pipeline_mode<synchronous>, transform_indices = @transform_8, window_bounds = array<i64: 1, 32>}, {pipeline_mode = #tpu.pipeline_mode<synchronous>, transform_indices = @transform_9, window_bounds = array<i64: 1, 32>}, {pipeline_mode = #tpu.pipeline_mode<synchronous>, transform_indices = @transform_10, window_bounds = array<i64: 1, 32>}, {pipeline_mode = #tpu.pipeline_mode<synchronous>, transform_indices = @transform_11, window_bounds = array<i64: 32, 64>}, {pipeline_mode = #tpu.pipeline_mode<synchronous>, transform_indices = @transform_12, window_bounds = array<i64: 1, 64>}, {pipeline_mode = #tpu.pipeline_mode<synchronous>, transform_indices = @transform_13, window_bounds = array<i64: 64, 32>}, {pipeline_mode = #tpu.pipeline_mode<synchronous>, transform_indices = @transform_14, window_bounds = array<i64: 1, 32>}, {pipeline_mode = #tpu.pipeline_mode<synchronous>, transform_indices = @transform_15, window_bounds = array<i64: 1, 32>}, {pipeline_mode = #tpu.pipeline_mode<synchronous>, transform_indices = @transform_16, window_bounds = array<i64: 1, 32>}, {transform_indices = @transform_17, window_bounds = array<i64: 1, 8, 32>}]} {
    %c0_i32 = arith.constant 0 : i32
    %0 = arith.cmpi eq, %arg1, %c0_i32 : i32
    %1 = arith.extui %0 : i1 to i32
    %c0_i32_0 = arith.constant 0 : i32
    %2 = arith.cmpi ne, %1, %c0_i32_0 : i32
    scf.if %2 {
      %c0_106 = arith.constant 0 : index
      %c0_107 = arith.constant 0 : index
      %c0_108 = arith.constant 0 : index
      %213 = vector.load %arg2[%c0_106, %c0_107, %c0_108] : memref<1x8x32xbf16, #tpu.memory_space<vmem>>, vector<1x8x32xbf16>
      %214 = vector.shape_cast %213 : vector<1x8x32xbf16> to vector<8x32xbf16>
      %c0_109 = arith.constant 0 : index
      %c0_110 = arith.constant 0 : index
      %215 = vector.load %arg7[%c0_109, %c0_110] : memref<32x64xbf16, #tpu.memory_space<vmem>>, vector<32x64xbf16>
      %cst_111 = arith.constant dense<0.000000e+00> : vector<8x64xf32>
      %216 = tpu.matmul %214, %215, %cst_111 {dimension_numbers = #tpu.dot_dimension_numbers<[1], [0], [0], [1], [0, 0, 1, 1], [], []>} : vector<8x32xbf16>, vector<32x64xbf16>, vector<8x64xf32> -> vector<8x64xf32>
      %c0_112 = arith.constant 0 : index
      %c0_113 = arith.constant 0 : index
      %217 = vector.load %arg8[%c0_112, %c0_113] : memref<1x64xf32, #tpu.memory_space<vmem>>, vector<1x64xf32>
      %218 = vector.broadcast %217 : vector<1x64xf32> to vector<8x64xf32>
      %219 = arith.addf %216, %218 : vector<8x64xf32>
      %220 = arith.truncf %219 : vector<8x64xf32> to vector<8x64xbf16>
      %221 = vector.extract_strided_slice %220 {offsets = [0, 0], sizes = [8, 8], strides = [1, 1]} : vector<8x64xbf16> to vector<8x8xbf16>
      %c0_114 = arith.constant 0 : index
      %c0_115 = arith.constant 0 : index
      %c0_116 = arith.constant 0 : index
      %222 = vector.load %arg20[%c0_114, %c0_115, %c0_116] : memref<4x8x8xbf16, #tpu.memory_space<vmem>>, vector<1x8x8xbf16>
      %223 = vector.shape_cast %222 : vector<1x8x8xbf16> to vector<8x8xbf16>
      %224 = vector.shape_cast %221 : vector<8x8xbf16> to vector<1x8x8xbf16>
      tpu.vector_store %arg20[%c0_114, %c0_115, %c0_116], %224 {strides = array<i32>} : memref<4x8x8xbf16, #tpu.memory_space<vmem>>, vector<1x8x8xbf16>,
      %225 = vector.extract_strided_slice %220 {offsets = [0, 32], sizes = [8, 8], strides = [1, 1]} : vector<8x64xbf16> to vector<8x8xbf16>
      %c0_117 = arith.constant 0 : index
      %c0_118 = arith.constant 0 : index
      %c0_119 = arith.constant 0 : index
      %226 = vector.load %arg21[%c0_117, %c0_118, %c0_119] : memref<4x8x8xbf16, #tpu.memory_space<vmem>>, vector<1x8x8xbf16>
      %227 = vector.shape_cast %226 : vector<1x8x8xbf16> to vector<8x8xbf16>
      %228 = vector.shape_cast %225 : vector<8x8xbf16> to vector<1x8x8xbf16>
      tpu.vector_store %arg21[%c0_117, %c0_118, %c0_119], %228 {strides = array<i32>} : memref<4x8x8xbf16, #tpu.memory_space<vmem>>, vector<1x8x8xbf16>,
      %229 = vector.extract_strided_slice %220 {offsets = [0, 8], sizes = [8, 8], strides = [1, 1]} : vector<8x64xbf16> to vector<8x8xbf16>
      %c1_120 = arith.constant 1 : index
      %c0_121 = arith.constant 0 : index
      %c0_122 = arith.constant 0 : index
      %230 = vector.load %arg20[%c1_120, %c0_121, %c0_122] : memref<4x8x8xbf16, #tpu.memory_space<vmem>>, vector<1x8x8xbf16>
      %231 = vector.shape_cast %230 : vector<1x8x8xbf16> to vector<8x8xbf16>
      %232 = vector.shape_cast %229 : vector<8x8xbf16> to vector<1x8x8xbf16>
      tpu.vector_store %arg20[%c1_120, %c0_121, %c0_122], %232 {strides = array<i32>} : memref<4x8x8xbf16, #tpu.memory_space<vmem>>, vector<1x8x8xbf16>,
      %233 = vector.extract_strided_slice %220 {offsets = [0, 40], sizes = [8, 8], strides = [1, 1]} : vector<8x64xbf16> to vector<8x8xbf16>
      %c1_123 = arith.constant 1 : index
      %c0_124 = arith.constant 0 : index
      %c0_125 = arith.constant 0 : index
      %234 = vector.load %arg21[%c1_123, %c0_124, %c0_125] : memref<4x8x8xbf16, #tpu.memory_space<vmem>>, vector<1x8x8xbf16>
      %235 = vector.shape_cast %234 : vector<1x8x8xbf16> to vector<8x8xbf16>
      %236 = vector.shape_cast %233 : vector<8x8xbf16> to vector<1x8x8xbf16>
      tpu.vector_store %arg21[%c1_123, %c0_124, %c0_125], %236 {strides = array<i32>} : memref<4x8x8xbf16, #tpu.memory_space<vmem>>, vector<1x8x8xbf16>,
      %237 = vector.extract_strided_slice %220 {offsets = [0, 16], sizes = [8, 8], strides = [1, 1]} : vector<8x64xbf16> to vector<8x8xbf16>
      %c2_126 = arith.constant 2 : index
      %c0_127 = arith.constant 0 : index
      %c0_128 = arith.constant 0 : index
      %238 = vector.load %arg20[%c2_126, %c0_127, %c0_128] : memref<4x8x8xbf16, #tpu.memory_space<vmem>>, vector<1x8x8xbf16>
      %239 = vector.shape_cast %238 : vector<1x8x8xbf16> to vector<8x8xbf16>
      %240 = vector.shape_cast %237 : vector<8x8xbf16> to vector<1x8x8xbf16>
      tpu.vector_store %arg20[%c2_126, %c0_127, %c0_128], %240 {strides = array<i32>} : memref<4x8x8xbf16, #tpu.memory_space<vmem>>, vector<1x8x8xbf16>,
      %241 = vector.extract_strided_slice %220 {offsets = [0, 48], sizes = [8, 8], strides = [1, 1]} : vector<8x64xbf16> to vector<8x8xbf16>
      %c2_129 = arith.constant 2 : index
      %c0_130 = arith.constant 0 : index
      %c0_131 = arith.constant 0 : index
      %242 = vector.load %arg21[%c2_129, %c0_130, %c0_131] : memref<4x8x8xbf16, #tpu.memory_space<vmem>>, vector<1x8x8xbf16>
      %243 = vector.shape_cast %242 : vector<1x8x8xbf16> to vector<8x8xbf16>
      %244 = vector.shape_cast %241 : vector<8x8xbf16> to vector<1x8x8xbf16>
      tpu.vector_store %arg21[%c2_129, %c0_130, %c0_131], %244 {strides = array<i32>} : memref<4x8x8xbf16, #tpu.memory_space<vmem>>, vector<1x8x8xbf16>,
      %245 = vector.extract_strided_slice %220 {offsets = [0, 24], sizes = [8, 8], strides = [1, 1]} : vector<8x64xbf16> to vector<8x8xbf16>
      %c3_132 = arith.constant 3 : index
      %c0_133 = arith.constant 0 : index
      %c0_134 = arith.constant 0 : index
      %246 = vector.load %arg20[%c3_132, %c0_133, %c0_134] : memref<4x8x8xbf16, #tpu.memory_space<vmem>>, vector<1x8x8xbf16>
      %247 = vector.shape_cast %246 : vector<1x8x8xbf16> to vector<8x8xbf16>
      %248 = vector.shape_cast %245 : vector<8x8xbf16> to vector<1x8x8xbf16>
      tpu.vector_store %arg20[%c3_132, %c0_133, %c0_134], %248 {strides = array<i32>} : memref<4x8x8xbf16, #tpu.memory_space<vmem>>, vector<1x8x8xbf16>,
      %249 = vector.extract_strided_slice %220 {offsets = [0, 56], sizes = [8, 8], strides = [1, 1]} : vector<8x64xbf16> to vector<8x8xbf16>
      %c3_135 = arith.constant 3 : index
      %c0_136 = arith.constant 0 : index
      %c0_137 = arith.constant 0 : index
      %250 = vector.load %arg21[%c3_135, %c0_136, %c0_137] : memref<4x8x8xbf16, #tpu.memory_space<vmem>>, vector<1x8x8xbf16>
      %251 = vector.shape_cast %250 : vector<1x8x8xbf16> to vector<8x8xbf16>
      %252 = vector.shape_cast %249 : vector<8x8xbf16> to vector<1x8x8xbf16>
      tpu.vector_store %arg21[%c3_135, %c0_136, %c0_137], %252 {strides = array<i32>} : memref<4x8x8xbf16, #tpu.memory_space<vmem>>, vector<1x8x8xbf16>,
    } else {
    }
    %c8_i32 = arith.constant 8 : i32
    %3 = arith.muli %arg1, %c8_i32 : i32
    %4 = tpu.assume_multiple %3, 8 : i32
    %c0 = arith.constant 0 : index
    %5 = arith.index_cast %4 : i32 to index
    %c0_1 = arith.constant 0 : index
    %6 = vector.load %arg2[%c0, %5, %c0_1] : memref<1x8x32xbf16, #tpu.memory_space<vmem>>, vector<1x8x32xbf16>
    %7 = vector.shape_cast %6 : vector<1x8x32xbf16> to vector<8x32xbf16>
    %8 = arith.extf %7 : vector<8x32xbf16> to vector<8x32xf32>
    %c0_2 = arith.constant 0 : index
    %c0_3 = arith.constant 0 : index
    %9 = vector.load %arg5[%c0_2, %c0_3] : memref<32x32xbf16, #tpu.memory_space<vmem>>, vector<32x32xbf16>
    %cst = arith.constant dense<0.000000e+00> : vector<8x32xf32>
    %10 = tpu.matmul %7, %9, %cst {dimension_numbers = #tpu.dot_dimension_numbers<[1], [0], [0], [1], [0, 0, 1, 1], [], []>} : vector<8x32xbf16>, vector<32x32xbf16>, vector<8x32xf32> -> vector<8x32xf32>
    %c0_4 = arith.constant 0 : index
    %c0_5 = arith.constant 0 : index
    %11 = vector.load %arg6[%c0_4, %c0_5] : memref<1x32xf32, #tpu.memory_space<vmem>>, vector<1x32xf32>
    %12 = vector.broadcast %11 : vector<1x32xf32> to vector<8x32xf32>
    %13 = arith.addf %10, %12 : vector<8x32xf32>
    %c0_i32_6 = arith.constant 0 : i32
    %14 = arith.cmpi eq, %arg1, %c0_i32_6 : i32
    %15 = arith.extui %14 : i1 to i32
    %c0_i32_7 = arith.constant 0 : i32
    %16 = arith.cmpi ne, %15, %c0_i32_7 : i32
    %17 = scf.if %16 -> (vector<8x32xf32>) {
      %c0_106 = arith.constant 0 : index
      %c0_107 = arith.constant 0 : index
      %c0_108 = arith.constant 0 : index
      %213 = vector.load %arg4[%c0_106, %c0_107, %c0_108] : memref<1x1x32xbf16, #tpu.memory_space<vmem>>, vector<1x1x32xbf16>
      %214 = vector.shape_cast %213 : vector<1x1x32xbf16> to vector<1x32xbf16>
      %c0_109 = arith.constant 0 : index
      %c0_110 = arith.constant 0 : index
      %215 = vector.load %arg5[%c0_109, %c0_110] : memref<32x32xbf16, #tpu.memory_space<vmem>>, vector<32x32xbf16>
      %cst_111 = arith.constant dense<0.000000e+00> : vector<1x32xf32>
      %216 = tpu.matmul %214, %215, %cst_111 {dimension_numbers = #tpu.dot_dimension_numbers<[1], [0], [0], [1], [0, 0, 1, 1], [], []>} : vector<1x32xbf16>, vector<32x32xbf16>, vector<1x32xf32> -> vector<1x32xf32>
      %c0_112 = arith.constant 0 : index
      %c0_113 = arith.constant 0 : index
      %217 = vector.load %arg6[%c0_112, %c0_113] : memref<1x32xf32, #tpu.memory_space<vmem>>, vector<1x32xf32>
      %218 = arith.addf %216, %217 : vector<1x32xf32>
      %219 = tpu.iota {dimensions = array<i32: 0>} : vector<8x1xi32>
      %c1_i32 = arith.constant 1 : i32
      %220 = vector.broadcast %c1_i32 : i32 to vector<8x1xi32>
      %221 = arith.cmpi eq, %219, %220 : vector<8x1xi32>
      %222 = vector.shape_cast %221 : vector<8x1xi1> to vector<8x1xi1>
      %223 = vector.broadcast %222 : vector<8x1xi1> to vector<8x32xi1>
      %224 = vector.shape_cast %218 : vector<1x32xf32> to vector<1x32xf32>
      %225 = vector.broadcast %224 : vector<1x32xf32> to vector<8x32xf32>
      %226 = arith.select %223, %225, %13 : vector<8x32xi1>, vector<8x32xf32>
      scf.yield %226 : vector<8x32xf32>
    } else {
      scf.yield %13 : vector<8x32xf32>
    }
    %18 = arith.truncf %17 : vector<8x32xf32> to vector<8x32xbf16>
    %c0_8 = arith.constant 0 : index
    %c0_9 = arith.constant 0 : index
    %c0_10 = arith.constant 0 : index
    %19 = vector.load %arg3[%c0_8, %c0_9, %c0_10] : memref<1x1x8xf32, #tpu.memory_space<vmem>>, vector<1x1x8xf32>
    %20 = vector.shape_cast %19 : vector<1x1x8xf32> to vector<1x8xf32>
    %cst_11 = arith.constant 0.000000e+00 : f32
    %21 = vector.broadcast %cst_11 : f32 to vector<8x32xf32>
    %22 = vector.extract_strided_slice %18 {offsets = [0, 0], sizes = [8, 8], strides = [1, 1]} : vector<8x32xbf16> to vector<8x8xbf16>
    %c0_12 = arith.constant 0 : index
    %c0_13 = arith.constant 0 : index
    %c0_14 = arith.constant 0 : index
    %23 = vector.load %arg20[%c0_12, %c0_13, %c0_14] : memref<4x8x8xbf16, #tpu.memory_space<vmem>>, vector<1x8x8xbf16>
    %24 = vector.shape_cast %23 : vector<1x8x8xbf16> to vector<8x8xbf16>
    %cst_15 = arith.constant dense<0.000000e+00> : vector<8x8xf32>
    %25 = tpu.matmul %22, %24, %cst_15 {dimension_numbers = #tpu.dot_dimension_numbers<[1], [1], [0], [0], [0, 0, 1, 0], [], []>} : vector<8x8xbf16>, vector<8x8xbf16>, vector<8x8xf32> -> vector<8x8xf32>
    %26 = vector.broadcast %20 : vector<1x8xf32> to vector<8x8xf32>
    %27 = arith.addf %25, %26 : vector<8x8xf32>
    %cst_16 = arith.constant dense<0xFF800000> : vector<8xf32>
    %28 = vector.multi_reduction <maximumf>, %27, %cst_16 [1] : vector<8x8xf32> to vector<8xf32>
    %29 = vector.shape_cast %28 : vector<8xf32> to vector<8x1xf32>
    %30 = vector.broadcast %29 : vector<8x1xf32> to vector<8x8xf32>
    %31 = arith.subf %27, %30 : vector<8x8xf32>
    %32 = math.exp %31 : vector<8x8xf32>
    %cst_17 = arith.constant dense<0.000000e+00> : vector<8xf32>
    %33 = vector.multi_reduction <add>, %32, %cst_17 [1] : vector<8x8xf32> to vector<8xf32>
    %34 = vector.shape_cast %33 : vector<8xf32> to vector<8x1xf32>
    %35 = tpu.reciprocal %34 {approx = true} : vector<8x1xf32> -> vector<8x1xf32>
    %36 = vector.broadcast %35 : vector<8x1xf32> to vector<8x8xf32>
    %37 = arith.mulf %32, %36 : vector<8x8xf32>
    %38 = arith.truncf %37 : vector<8x8xf32> to vector<8x8xbf16>
    %c0_18 = arith.constant 0 : index
    %c0_19 = arith.constant 0 : index
    %c0_20 = arith.constant 0 : index
    %39 = vector.load %arg21[%c0_18, %c0_19, %c0_20] : memref<4x8x8xbf16, #tpu.memory_space<vmem>>, vector<1x8x8xbf16>
    %40 = vector.shape_cast %39 : vector<1x8x8xbf16> to vector<8x8xbf16>
    %cst_21 = arith.constant dense<0.000000e+00> : vector<8x8xf32>
    %41 = tpu.matmul %38, %40, %cst_21 {dimension_numbers = #tpu.dot_dimension_numbers<[1], [0], [0], [1], [0, 0, 1, 1], [], []>} : vector<8x8xbf16>, vector<8x8xbf16>, vector<8x8xf32> -> vector<8x8xf32>
    %42 = arith.truncf %41 : vector<8x8xf32> to vector<8x8xbf16>
    %c0_22 = arith.constant 0 : index
    %c0_23 = arith.constant 0 : index
    %c0_24 = arith.constant 0 : index
    %43 = vector.load %arg9[%c0_22, %c0_23, %c0_24] : memref<4x8x32xbf16, #tpu.memory_space<vmem>>, vector<1x8x32xbf16>
    %44 = vector.shape_cast %43 : vector<1x8x32xbf16> to vector<8x32xbf16>
    %cst_25 = arith.constant dense<0.000000e+00> : vector<8x32xf32>
    %45 = tpu.matmul %42, %44, %cst_25 {dimension_numbers = #tpu.dot_dimension_numbers<[1], [0], [0], [1], [0, 0, 1, 1], [], []>} : vector<8x8xbf16>, vector<8x32xbf16>, vector<8x32xf32> -> vector<8x32xf32>
    %46 = arith.addf %21, %45 : vector<8x32xf32>
    %47 = vector.extract_strided_slice %18 {offsets = [0, 8], sizes = [8, 8], strides = [1, 1]} : vector<8x32xbf16> to vector<8x8xbf16>
    %c1 = arith.constant 1 : index
    %c0_26 = arith.constant 0 : index
    %c0_27 = arith.constant 0 : index
    %48 = vector.load %arg20[%c1, %c0_26, %c0_27] : memref<4x8x8xbf16, #tpu.memory_space<vmem>>, vector<1x8x8xbf16>
    %49 = vector.shape_cast %48 : vector<1x8x8xbf16> to vector<8x8xbf16>
    %cst_28 = arith.constant dense<0.000000e+00> : vector<8x8xf32>
    %50 = tpu.matmul %47, %49, %cst_28 {dimension_numbers = #tpu.dot_dimension_numbers<[1], [1], [0], [0], [0, 0, 1, 0], [], []>} : vector<8x8xbf16>, vector<8x8xbf16>, vector<8x8xf32> -> vector<8x8xf32>
    %51 = vector.broadcast %20 : vector<1x8xf32> to vector<8x8xf32>
    %52 = arith.addf %50, %51 : vector<8x8xf32>
    %cst_29 = arith.constant dense<0xFF800000> : vector<8xf32>
    %53 = vector.multi_reduction <maximumf>, %52, %cst_29 [1] : vector<8x8xf32> to vector<8xf32>
    %54 = vector.shape_cast %53 : vector<8xf32> to vector<8x1xf32>
    %55 = vector.broadcast %54 : vector<8x1xf32> to vector<8x8xf32>
    %56 = arith.subf %52, %55 : vector<8x8xf32>
    %57 = math.exp %56 : vector<8x8xf32>
    %cst_30 = arith.constant dense<0.000000e+00> : vector<8xf32>
    %58 = vector.multi_reduction <add>, %57, %cst_30 [1] : vector<8x8xf32> to vector<8xf32>
    %59 = vector.shape_cast %58 : vector<8xf32> to vector<8x1xf32>
    %60 = tpu.reciprocal %59 {approx = true} : vector<8x1xf32> -> vector<8x1xf32>
    %61 = vector.broadcast %60 : vector<8x1xf32> to vector<8x8xf32>
    %62 = arith.mulf %57, %61 : vector<8x8xf32>
    %63 = arith.truncf %62 : vector<8x8xf32> to vector<8x8xbf16>
    %c1_31 = arith.constant 1 : index
    %c0_32 = arith.constant 0 : index
    %c0_33 = arith.constant 0 : index
    %64 = vector.load %arg21[%c1_31, %c0_32, %c0_33] : memref<4x8x8xbf16, #tpu.memory_space<vmem>>, vector<1x8x8xbf16>
    %65 = vector.shape_cast %64 : vector<1x8x8xbf16> to vector<8x8xbf16>
    %cst_34 = arith.constant dense<0.000000e+00> : vector<8x8xf32>
    %66 = tpu.matmul %63, %65, %cst_34 {dimension_numbers = #tpu.dot_dimension_numbers<[1], [0], [0], [1], [0, 0, 1, 1], [], []>} : vector<8x8xbf16>, vector<8x8xbf16>, vector<8x8xf32> -> vector<8x8xf32>
    %67 = arith.truncf %66 : vector<8x8xf32> to vector<8x8xbf16>
    %c1_35 = arith.constant 1 : index
    %c0_36 = arith.constant 0 : index
    %c0_37 = arith.constant 0 : index
    %68 = vector.load %arg9[%c1_35, %c0_36, %c0_37] : memref<4x8x32xbf16, #tpu.memory_space<vmem>>, vector<1x8x32xbf16>
    %69 = vector.shape_cast %68 : vector<1x8x32xbf16> to vector<8x32xbf16>
    %cst_38 = arith.constant dense<0.000000e+00> : vector<8x32xf32>
    %70 = tpu.matmul %67, %69, %cst_38 {dimension_numbers = #tpu.dot_dimension_numbers<[1], [0], [0], [1], [0, 0, 1, 1], [], []>} : vector<8x8xbf16>, vector<8x32xbf16>, vector<8x32xf32> -> vector<8x32xf32>
    %71 = arith.addf %46, %70 : vector<8x32xf32>
    %72 = vector.extract_strided_slice %18 {offsets = [0, 16], sizes = [8, 8], strides = [1, 1]} : vector<8x32xbf16> to vector<8x8xbf16>
    %c2 = arith.constant 2 : index
    %c0_39 = arith.constant 0 : index
    %c0_40 = arith.constant 0 : index
    %73 = vector.load %arg20[%c2, %c0_39, %c0_40] : memref<4x8x8xbf16, #tpu.memory_space<vmem>>, vector<1x8x8xbf16>
    %74 = vector.shape_cast %73 : vector<1x8x8xbf16> to vector<8x8xbf16>
    %cst_41 = arith.constant dense<0.000000e+00> : vector<8x8xf32>
    %75 = tpu.matmul %72, %74, %cst_41 {dimension_numbers = #tpu.dot_dimension_numbers<[1], [1], [0], [0], [0, 0, 1, 0], [], []>} : vector<8x8xbf16>, vector<8x8xbf16>, vector<8x8xf32> -> vector<8x8xf32>
    %76 = vector.broadcast %20 : vector<1x8xf32> to vector<8x8xf32>
    %77 = arith.addf %75, %76 : vector<8x8xf32>
    %cst_42 = arith.constant dense<0xFF800000> : vector<8xf32>
    %78 = vector.multi_reduction <maximumf>, %77, %cst_42 [1] : vector<8x8xf32> to vector<8xf32>
    %79 = vector.shape_cast %78 : vector<8xf32> to vector<8x1xf32>
    %80 = vector.broadcast %79 : vector<8x1xf32> to vector<8x8xf32>
    %81 = arith.subf %77, %80 : vector<8x8xf32>
    %82 = math.exp %81 : vector<8x8xf32>
    %cst_43 = arith.constant dense<0.000000e+00> : vector<8xf32>
    %83 = vector.multi_reduction <add>, %82, %cst_43 [1] : vector<8x8xf32> to vector<8xf32>
    %84 = vector.shape_cast %83 : vector<8xf32> to vector<8x1xf32>
    %85 = tpu.reciprocal %84 {approx = true} : vector<8x1xf32> -> vector<8x1xf32>
    %86 = vector.broadcast %85 : vector<8x1xf32> to vector<8x8xf32>
    %87 = arith.mulf %82, %86 : vector<8x8xf32>
    %88 = arith.truncf %87 : vector<8x8xf32> to vector<8x8xbf16>
    %c2_44 = arith.constant 2 : index
    %c0_45 = arith.constant 0 : index
    %c0_46 = arith.constant 0 : index
    %89 = vector.load %arg21[%c2_44, %c0_45, %c0_46] : memref<4x8x8xbf16, #tpu.memory_space<vmem>>, vector<1x8x8xbf16>
    %90 = vector.shape_cast %89 : vector<1x8x8xbf16> to vector<8x8xbf16>
    %cst_47 = arith.constant dense<0.000000e+00> : vector<8x8xf32>
    %91 = tpu.matmul %88, %90, %cst_47 {dimension_numbers = #tpu.dot_dimension_numbers<[1], [0], [0], [1], [0, 0, 1, 1], [], []>} : vector<8x8xbf16>, vector<8x8xbf16>, vector<8x8xf32> -> vector<8x8xf32>
    %92 = arith.truncf %91 : vector<8x8xf32> to vector<8x8xbf16>
    %c2_48 = arith.constant 2 : index
    %c0_49 = arith.constant 0 : index
    %c0_50 = arith.constant 0 : index
    %93 = vector.load %arg9[%c2_48, %c0_49, %c0_50] : memref<4x8x32xbf16, #tpu.memory_space<vmem>>, vector<1x8x32xbf16>
    %94 = vector.shape_cast %93 : vector<1x8x32xbf16> to vector<8x32xbf16>
    %cst_51 = arith.constant dense<0.000000e+00> : vector<8x32xf32>
    %95 = tpu.matmul %92, %94, %cst_51 {dimension_numbers = #tpu.dot_dimension_numbers<[1], [0], [0], [1], [0, 0, 1, 1], [], []>} : vector<8x8xbf16>, vector<8x32xbf16>, vector<8x32xf32> -> vector<8x32xf32>
    %96 = arith.addf %71, %95 : vector<8x32xf32>
    %97 = vector.extract_strided_slice %18 {offsets = [0, 24], sizes = [8, 8], strides = [1, 1]} : vector<8x32xbf16> to vector<8x8xbf16>
    %c3 = arith.constant 3 : index
    %c0_52 = arith.constant 0 : index
    %c0_53 = arith.constant 0 : index
    %98 = vector.load %arg20[%c3, %c0_52, %c0_53] : memref<4x8x8xbf16, #tpu.memory_space<vmem>>, vector<1x8x8xbf16>
    %99 = vector.shape_cast %98 : vector<1x8x8xbf16> to vector<8x8xbf16>
    %cst_54 = arith.constant dense<0.000000e+00> : vector<8x8xf32>
    %100 = tpu.matmul %97, %99, %cst_54 {dimension_numbers = #tpu.dot_dimension_numbers<[1], [1], [0], [0], [0, 0, 1, 0], [], []>} : vector<8x8xbf16>, vector<8x8xbf16>, vector<8x8xf32> -> vector<8x8xf32>
    %101 = vector.broadcast %20 : vector<1x8xf32> to vector<8x8xf32>
    %102 = arith.addf %100, %101 : vector<8x8xf32>
    %cst_55 = arith.constant dense<0xFF800000> : vector<8xf32>
    %103 = vector.multi_reduction <maximumf>, %102, %cst_55 [1] : vector<8x8xf32> to vector<8xf32>
    %104 = vector.shape_cast %103 : vector<8xf32> to vector<8x1xf32>
    %105 = vector.broadcast %104 : vector<8x1xf32> to vector<8x8xf32>
    %106 = arith.subf %102, %105 : vector<8x8xf32>
    %107 = math.exp %106 : vector<8x8xf32>
    %cst_56 = arith.constant dense<0.000000e+00> : vector<8xf32>
    %108 = vector.multi_reduction <add>, %107, %cst_56 [1] : vector<8x8xf32> to vector<8xf32>
    %109 = vector.shape_cast %108 : vector<8xf32> to vector<8x1xf32>
    %110 = tpu.reciprocal %109 {approx = true} : vector<8x1xf32> -> vector<8x1xf32>
    %111 = vector.broadcast %110 : vector<8x1xf32> to vector<8x8xf32>
    %112 = arith.mulf %107, %111 : vector<8x8xf32>
    %113 = arith.truncf %112 : vector<8x8xf32> to vector<8x8xbf16>
    %c3_57 = arith.constant 3 : index
    %c0_58 = arith.constant 0 : index
    %c0_59 = arith.constant 0 : index
    %114 = vector.load %arg21[%c3_57, %c0_58, %c0_59] : memref<4x8x8xbf16, #tpu.memory_space<vmem>>, vector<1x8x8xbf16>
    %115 = vector.shape_cast %114 : vector<1x8x8xbf16> to vector<8x8xbf16>
    %cst_60 = arith.constant dense<0.000000e+00> : vector<8x8xf32>
    %116 = tpu.matmul %113, %115, %cst_60 {dimension_numbers = #tpu.dot_dimension_numbers<[1], [0], [0], [1], [0, 0, 1, 1], [], []>} : vector<8x8xbf16>, vector<8x8xbf16>, vector<8x8xf32> -> vector<8x8xf32>
    %117 = arith.truncf %116 : vector<8x8xf32> to vector<8x8xbf16>
    %c3_61 = arith.constant 3 : index
    %c0_62 = arith.constant 0 : index
    %c0_63 = arith.constant 0 : index
    %118 = vector.load %arg9[%c3_61, %c0_62, %c0_63] : memref<4x8x32xbf16, #tpu.memory_space<vmem>>, vector<1x8x32xbf16>
    %119 = vector.shape_cast %118 : vector<1x8x32xbf16> to vector<8x32xbf16>
    %cst_64 = arith.constant dense<0.000000e+00> : vector<8x32xf32>
    %120 = tpu.matmul %117, %119, %cst_64 {dimension_numbers = #tpu.dot_dimension_numbers<[1], [0], [0], [1], [0, 0, 1, 1], [], []>} : vector<8x8xbf16>, vector<8x32xbf16>, vector<8x32xf32> -> vector<8x32xf32>
    %121 = arith.addf %96, %120 : vector<8x32xf32>
    %c0_65 = arith.constant 0 : index
    %c0_66 = arith.constant 0 : index
    %122 = vector.load %arg10[%c0_65, %c0_66] : memref<1x32xf32, #tpu.memory_space<vmem>>, vector<1x32xf32>
    %123 = vector.broadcast %122 : vector<1x32xf32> to vector<8x32xf32>
    %124 = arith.addf %121, %123 : vector<8x32xf32>
    %125 = arith.addf %8, %124 : vector<8x32xf32>
    %c0_67 = arith.constant 0 : index
    %c0_68 = arith.constant 0 : index
    %126 = vector.load %arg11[%c0_67, %c0_68] : memref<1x32xf32, #tpu.memory_space<vmem>>, vector<1x32xf32>
    %c0_69 = arith.constant 0 : index
    %c0_70 = arith.constant 0 : index
    %127 = vector.load %arg12[%c0_69, %c0_70] : memref<1x32xf32, #tpu.memory_space<vmem>>, vector<1x32xf32>
    %cst_71 = arith.constant dense<0.000000e+00> : vector<8xf32>
    %128 = vector.multi_reduction <add>, %125, %cst_71 [1] : vector<8x32xf32> to vector<8xf32>
    %129 = vector.shape_cast %128 : vector<8xf32> to vector<8x1xf32>
    %cst_72 = arith.constant 3.200000e+01 : f32
    %130 = vector.broadcast %cst_72 : f32 to vector<8x1xf32>
    %131 = arith.divf %129, %130 : vector<8x1xf32>
    %132 = vector.broadcast %131 : vector<8x1xf32> to vector<8x32xf32>
    %133 = arith.subf %125, %132 : vector<8x32xf32>
    %134 = arith.mulf %133, %133 : vector<8x32xf32>
    %cst_73 = arith.constant dense<0.000000e+00> : vector<8xf32>
    %135 = vector.multi_reduction <add>, %134, %cst_73 [1] : vector<8x32xf32> to vector<8xf32>
    %136 = vector.shape_cast %135 : vector<8xf32> to vector<8x1xf32>
    %cst_74 = arith.constant 3.200000e+01 : f32
    %137 = vector.broadcast %cst_74 : f32 to vector<8x1xf32>
    %138 = arith.divf %136, %137 : vector<8x1xf32>
    %cst_75 = arith.constant 9.99999996E-13 : f32
    %139 = vector.broadcast %cst_75 : f32 to vector<8x1xf32>
    %140 = arith.addf %138, %139 : vector<8x1xf32>
    %141 = math.rsqrt %140 : vector<8x1xf32>
    %142 = vector.broadcast %141 : vector<8x1xf32> to vector<8x32xf32>
    %143 = arith.mulf %133, %142 : vector<8x32xf32>
    %144 = vector.broadcast %126 : vector<1x32xf32> to vector<8x32xf32>
    %145 = arith.mulf %143, %144 : vector<8x32xf32>
    %146 = vector.broadcast %127 : vector<1x32xf32> to vector<8x32xf32>
    %147 = arith.addf %145, %146 : vector<8x32xf32>
    %148 = arith.truncf %147 : vector<8x32xf32> to vector<8x32xbf16>
    %c0_76 = arith.constant 0 : index
    %c0_77 = arith.constant 0 : index
    %149 = vector.load %arg13[%c0_76, %c0_77] : memref<32x64xbf16, #tpu.memory_space<vmem>>, vector<32x64xbf16>
    %cst_78 = arith.constant dense<0.000000e+00> : vector<8x64xf32>
    %150 = tpu.matmul %148, %149, %cst_78 {dimension_numbers = #tpu.dot_dimension_numbers<[1], [0], [0], [1], [0, 0, 1, 1], [], []>} : vector<8x32xbf16>, vector<32x64xbf16>, vector<8x64xf32> -> vector<8x64xf32>
    %c0_79 = arith.constant 0 : index
    %c0_80 = arith.constant 0 : index
    %151 = vector.load %arg14[%c0_79, %c0_80] : memref<1x64xf32, #tpu.memory_space<vmem>>, vector<1x64xf32>
    %152 = vector.broadcast %151 : vector<1x64xf32> to vector<8x64xf32>
    %153 = arith.addf %150, %152 : vector<8x64xf32>
    %cst_81 = arith.constant 5.000000e-01 : f32
    %154 = vector.broadcast %cst_81 : f32 to vector<8x64xf32>
    %155 = arith.mulf %154, %153 : vector<8x64xf32>
    %cst_82 = arith.constant 4.471500e-02 : f32
    %156 = vector.broadcast %cst_82 : f32 to vector<8x64xf32>
    %157 = arith.mulf %156, %153 : vector<8x64xf32>
    %158 = arith.mulf %157, %153 : vector<8x64xf32>
    %159 = arith.mulf %158, %153 : vector<8x64xf32>
    %160 = arith.addf %153, %159 : vector<8x64xf32>
    %cst_83 = arith.constant 0.797884583 : f32
    %161 = vector.broadcast %cst_83 : f32 to vector<8x64xf32>
    %162 = arith.mulf %161, %160 : vector<8x64xf32>
    %163 = math.tanh %162 : vector<8x64xf32>
    %cst_84 = arith.constant 1.000000e+00 : f32
    %164 = vector.broadcast %cst_84 : f32 to vector<8x64xf32>
    %165 = arith.addf %164, %163 : vector<8x64xf32>
    %166 = arith.mulf %155, %165 : vector<8x64xf32>
    %cst_85 = arith.constant 5.000000e-01 : f32
    %167 = vector.broadcast %cst_85 : f32 to vector<8x64xf32>
    %168 = arith.mulf %167, %166 : vector<8x64xf32>
    %cst_86 = arith.constant 4.471500e-02 : f32
    %169 = vector.broadcast %cst_86 : f32 to vector<8x64xf32>
    %170 = arith.mulf %169, %166 : vector<8x64xf32>
    %171 = arith.mulf %170, %166 : vector<8x64xf32>
    %172 = arith.mulf %171, %166 : vector<8x64xf32>
    %173 = arith.addf %166, %172 : vector<8x64xf32>
    %cst_87 = arith.constant 0.797884583 : f32
    %174 = vector.broadcast %cst_87 : f32 to vector<8x64xf32>
    %175 = arith.mulf %174, %173 : vector<8x64xf32>
    %176 = math.tanh %175 : vector<8x64xf32>
    %cst_88 = arith.constant 1.000000e+00 : f32
    %177 = vector.broadcast %cst_88 : f32 to vector<8x64xf32>
    %178 = arith.addf %177, %176 : vector<8x64xf32>
    %179 = arith.mulf %168, %178 : vector<8x64xf32>
    %180 = arith.truncf %179 : vector<8x64xf32> to vector<8x64xbf16>
    %c0_89 = arith.constant 0 : index
    %c0_90 = arith.constant 0 : index
    %181 = vector.load %arg15[%c0_89, %c0_90] : memref<64x32xbf16, #tpu.memory_space<vmem>>, vector<64x32xbf16>
    %cst_91 = arith.constant dense<0.000000e+00> : vector<8x32xf32>
    %182 = tpu.matmul %180, %181, %cst_91 {dimension_numbers = #tpu.dot_dimension_numbers<[1], [0], [0], [1], [0, 0, 1, 1], [], []>} : vector<8x64xbf16>, vector<64x32xbf16>, vector<8x32xf32> -> vector<8x32xf32>
    %c0_92 = arith.constant 0 : index
    %c0_93 = arith.constant 0 : index
    %183 = vector.load %arg16[%c0_92, %c0_93] : memref<1x32xf32, #tpu.memory_space<vmem>>, vector<1x32xf32>
    %184 = vector.broadcast %183 : vector<1x32xf32> to vector<8x32xf32>
    %185 = arith.addf %182, %184 : vector<8x32xf32>
    %186 = arith.addf %147, %185 : vector<8x32xf32>
    %c0_94 = arith.constant 0 : index
    %c0_95 = arith.constant 0 : index
    %187 = vector.load %arg17[%c0_94, %c0_95] : memref<1x32xf32, #tpu.memory_space<vmem>>, vector<1x32xf32>
    %c0_96 = arith.constant 0 : index
    %c0_97 = arith.constant 0 : index
    %188 = vector.load %arg18[%c0_96, %c0_97] : memref<1x32xf32, #tpu.memory_space<vmem>>, vector<1x32xf32>
    %cst_98 = arith.constant dense<0.000000e+00> : vector<8xf32>
    %189 = vector.multi_reduction <add>, %186, %cst_98 [1] : vector<8x32xf32> to vector<8xf32>
    %190 = vector.shape_cast %189 : vector<8xf32> to vector<8x1xf32>
    %cst_99 = arith.constant 3.200000e+01 : f32
    %191 = vector.broadcast %cst_99 : f32 to vector<8x1xf32>
    %192 = arith.divf %190, %191 : vector<8x1xf32>
    %193 = vector.broadcast %192 : vector<8x1xf32> to vector<8x32xf32>
    %194 = arith.subf %186, %193 : vector<8x32xf32>
    %195 = arith.mulf %194, %194 : vector<8x32xf32>
    %cst_100 = arith.constant dense<0.000000e+00> : vector<8xf32>
    %196 = vector.multi_reduction <add>, %195, %cst_100 [1] : vector<8x32xf32> to vector<8xf32>
    %197 = vector.shape_cast %196 : vector<8xf32> to vector<8x1xf32>
    %cst_101 = arith.constant 3.200000e+01 : f32
    %198 = vector.broadcast %cst_101 : f32 to vector<8x1xf32>
    %199 = arith.divf %197, %198 : vector<8x1xf32>
    %cst_102 = arith.constant 9.99999996E-13 : f32
    %200 = vector.broadcast %cst_102 : f32 to vector<8x1xf32>
    %201 = arith.addf %199, %200 : vector<8x1xf32>
    %202 = math.rsqrt %201 : vector<8x1xf32>
    %203 = vector.broadcast %202 : vector<8x1xf32> to vector<8x32xf32>
    %204 = arith.mulf %194, %203 : vector<8x32xf32>
    %205 = vector.broadcast %187 : vector<1x32xf32> to vector<8x32xf32>
    %206 = arith.mulf %204, %205 : vector<8x32xf32>
    %207 = vector.broadcast %188 : vector<1x32xf32> to vector<8x32xf32>
    %208 = arith.addf %206, %207 : vector<8x32xf32>
    %209 = arith.truncf %208 : vector<8x32xf32> to vector<8x32xbf16>
    %c0_103 = arith.constant 0 : index
    %c0_104 = arith.constant 0 : index
    %c0_105 = arith.constant 0 : index
    %210 = vector.load %arg19[%c0_103, %c0_104, %c0_105] : memref<1x8x32xbf16, #tpu.memory_space<vmem>>, vector<1x8x32xbf16>
    %211 = vector.shape_cast %210 : vector<1x8x32xbf16> to vector<8x32xbf16>
    %212 = vector.shape_cast %209 : vector<8x32xbf16> to vector<1x8x32xbf16>
    tpu.vector_store %arg19[%c0_103, %c0_104, %c0_105], %212 {strides = array<i32>} : memref<1x8x32xbf16, #tpu.memory_space<vmem>>, vector<1x8x32xbf16>,
    return
  }
  func.func @transform_0(%arg0: i32, %arg1: i32) -> (i32, i32, i32) {
    %c0_i32 = arith.constant 0 : i32
    %c0_i32_0 = arith.constant 0 : i32
    %c0_i32_1 = arith.constant 0 : i32
    return %arg0, %c0_i32, %c0_i32_0 : i32, i32, i32
  }
  func.func @transform_1(%arg0: i32, %arg1: i32) -> (i32, i32, i32) {
    %c0_i32 = arith.constant 0 : i32
    %c0_i32_0 = arith.constant 0 : i32
    %c0_i32_1 = arith.constant 0 : i32
    return %arg0, %c0_i32, %c0_i32_0 : i32, i32, i32
  }
  func.func @transform_2(%arg0: i32, %arg1: i32) -> (i32, i32, i32) {
    %c0_i32 = arith.constant 0 : i32
    %c0_i32_0 = arith.constant 0 : i32
    %c0_i32_1 = arith.constant 0 : i32
    return %arg0, %c0_i32, %c0_i32_0 : i32, i32, i32
  }
  func.func @transform_3(%arg0: i32, %arg1: i32) -> (i32, i32) {
    %c0_i32 = arith.constant 0 : i32
    %c0_i32_0 = arith.constant 0 : i32
    %c0_i32_1 = arith.constant 0 : i32
    return %c0_i32, %c0_i32_0 : i32, i32
  }
  func.func @transform_4(%arg0: i32, %arg1: i32) -> (i32, i32) {
    %c0_i32 = arith.constant 0 : i32
    %c0_i32_0 = arith.constant 0 : i32
    %c0_i32_1 = arith.constant 0 : i32
    return %c0_i32, %c0_i32_0 : i32, i32
  }
  func.func @transform_5(%arg0: i32, %arg1: i32) -> (i32, i32) {
    %c0_i32 = arith.constant 0 : i32
    %c0_i32_0 = arith.constant 0 : i32
    %c0_i32_1 = arith.constant 0 : i32
    return %c0_i32, %c0_i32_0 : i32, i32
  }
  func.func @transform_6(%arg0: i32, %arg1: i32) -> (i32, i32) {
    %c0_i32 = arith.constant 0 : i32
    %c0_i32_0 = arith.constant 0 : i32
    %c0_i32_1 = arith.constant 0 : i32
    return %c0_i32, %c0_i32_0 : i32, i32
  }
  func.func @transform_7(%arg0: i32, %arg1: i32) -> (i32, i32, i32) {
    %c0_i32 = arith.constant 0 : i32
    %c0_i32_0 = arith.constant 0 : i32
    %c0_i32_1 = arith.constant 0 : i32
    %c0_i32_2 = arith.constant 0 : i32
    return %c0_i32, %c0_i32_0, %c0_i32_1 : i32, i32, i32
  }
  func.func @transform_8(%arg0: i32, %arg1: i32) -> (i32, i32) {
    %c0_i32 = arith.constant 0 : i32
    %c0_i32_0 = arith.constant 0 : i32
    %c0_i32_1 = arith.constant 0 : i32
    return %c0_i32, %c0_i32_0 : i32, i32
  }
  func.func @transform_9(%arg0: i32, %arg1: i32) -> (i32, i32) {
    %c0_i32 = arith.constant 0 : i32
    %c0_i32_0 = arith.constant 0 : i32
    %c0_i32_1 = arith.constant 0 : i32
    return %c0_i32, %c0_i32_0 : i32, i32
  }
  func.func @transform_10(%arg0: i32, %arg1: i32) -> (i32, i32) {
    %c0_i32 = arith.constant 0 : i32
    %c0_i32_0 = arith.constant 0 : i32
    %c0_i32_1 = arith.constant 0 : i32
    return %c0_i32, %c0_i32_0 : i32, i32
  }
  func.func @transform_11(%arg0: i32, %arg1: i32) -> (i32, i32) {
    %c0_i32 = arith.constant 0 : i32
    %c0_i32_0 = arith.constant 0 : i32
    %c0_i32_1 = arith.constant 0 : i32
    return %c0_i32, %c0_i32_0 : i32, i32
  }
  func.func @transform_12(%arg0: i32, %arg1: i32) -> (i32, i32) {
    %c0_i32 = arith.constant 0 : i32
    %c0_i32_0 = arith.constant 0 : i32
    %c0_i32_1 = arith.constant 0 : i32
    return %c0_i32, %c0_i32_0 : i32, i32
  }
  func.func @transform_13(%arg0: i32, %arg1: i32) -> (i32, i32) {
    %c0_i32 = arith.constant 0 : i32
    %c0_i32_0 = arith.constant 0 : i32
    %c0_i32_1 = arith.constant 0 : i32
    return %c0_i32, %c0_i32_0 : i32, i32
  }
  func.func @transform_14(%arg0: i32, %arg1: i32) -> (i32, i32) {
    %c0_i32 = arith.constant 0 : i32
    %c0_i32_0 = arith.constant 0 : i32
    %c0_i32_1 = arith.constant 0 : i32
    return %c0_i32, %c0_i32_0 : i32, i32
  }
  func.func @transform_15(%arg0: i32, %arg1: i32) -> (i32, i32) {
    %c0_i32 = arith.constant 0 : i32
    %c0_i32_0 = arith.constant 0 : i32
    %c0_i32_1 = arith.constant 0 : i32
    return %c0_i32, %c0_i32_0 : i32, i32
  }
  func.func @transform_16(%arg0: i32, %arg1: i32) -> (i32, i32) {
    %c0_i32 = arith.constant 0 : i32
    %c0_i32_0 = arith.constant 0 : i32
    %c0_i32_1 = arith.constant 0 : i32
    return %c0_i32, %c0_i32_0 : i32, i32
  }
  func.func @transform_17(%arg0: i32, %arg1: i32) -> (i32, i32, i32) {
    %c0_i32 = arith.constant 0 : i32
    %c0_i32_0 = arith.constant 0 : i32
    return %arg0, %arg1, %c0_i32 : i32, i32, i32
  }
}

</mosaic_0001>

<llo_original>
// kernel: tpu_custom_call.1
$region0: #{tpu_custom_call.1}
  #allocation0 [shape = 'u32[]', space=smem, size = 0x4, offset = 0x4, fixed_abs, tag = 'smem constant byte address 0x4 - core index']
  #allocation1 [shape = 'u32[144,128]{1,0:T(1,128)}', space=vmem, size = 0x12000, scoped, tag = 'internal scratch']
  #allocation2 [shape = 'bf16[4,8,8]{2,1,0:T(8,128)(2,1)}', space=vmem, size = 0x2000, scoped, tag = 'scratch operand']
  #allocation3 [shape = 'bf16[4,8,8]{2,1,0:T(8,128)(2,1)}', space=vmem, size = 0x2000, scoped, tag = 'scratch operand']
  %s0 = inlined_call_operand.hbm [shape: bf16[2,8,32], index: 0, kind: input, shape index: {}]
  %s1 = inlined_call_operand.vmem [shape: f32[2,1,8], index: 1, kind: input, shape index: {}]
  %s2 = inlined_call_operand.vmem [shape: bf16[2,1,32], index: 2, kind: input, shape index: {}]
  %s3 = inlined_call_operand.vmem [shape: bf16[32,32], index: 3, kind: input, shape index: {}]
  %s4 = inlined_call_operand.hbm [shape: f32[1,32], index: 4, kind: input, shape index: {}]
  %s5 = inlined_call_operand.vmem [shape: bf16[32,64], index: 5, kind: input, shape index: {}]
  %s6 = inlined_call_operand.hbm [shape: f32[1,64], index: 6, kind: input, shape index: {}]
  %s7 = inlined_call_operand.vmem [shape: bf16[4,8,32], index: 7, kind: input, shape index: {}]
  %s8 = inlined_call_operand.hbm [shape: f32[1,32], index: 8, kind: input, shape index: {}]
  %s9 = inlined_call_operand.vmem [shape: f32[1,32], index: 9, kind: input, shape index: {}]
  %s10 = inlined_call_operand.vmem [shape: f32[1,32], index: 10, kind: input, shape index: {}]
  %s11 = inlined_call_operand.vmem [shape: bf16[32,64], index: 11, kind: input, shape index: {}]
  %s12 = inlined_call_operand.vmem [shape: f32[1,64], index: 12, kind: input, shape index: {}]
  %s13 = inlined_call_operand.vmem [shape: bf16[64,32], index: 13, kind: input, shape index: {}]
  %s14 = inlined_call_operand.vmem [shape: f32[1,32], index: 14, kind: input, shape index: {}]
  %s15 = inlined_call_operand.vmem [shape: f32[1,32], index: 15, kind: input, shape index: {}]
  %s16 = inlined_call_operand.vmem [shape: f32[1,32], index: 16, kind: input, shape index: {}]
  %s17 = inlined_call_operand.hbm [shape: bf16[2,8,32], index: 17, kind: output, shape index: {}]
  %s18 = sld [smem:[#allocation0]]
  $region129: #{tpu_custom_call.1} parent=0
    _
  %s20 = ssub.s32 1, %s18
  %s21 = scalar_select 0, %s20, %s18
  $region1: #{tpu_custom_call.1} parent=0
    #allocation4 [shape = 'u8[4096]{0}', space=vmem, size = 0x1000, scoped, tag = 'input window, operand 0']
    #allocation5 [shape = 's32[2]{0}', space=sflag, size = 0x8, scoped, tag = 'scoped memory for tpu_custom_call.1']
    #allocation6 [shape = 's32[2]{0}', space=sflag, size = 0x8, scoped, tag = 'scoped memory for tpu_custom_call.1']
    #allocation7 [shape = 'u8[512]{0}', space=vmem, size = 0x400, scoped, tag = 'input window, operand 4, single buffered']
    #allocation8 [shape = 's32[1]{0}', space=sflag, size = 0x4, scoped, tag = 'scoped memory for tpu_custom_call.1']
    #allocation9 [shape = 'u8[512]{0}', space=vmem, size = 0x400, scoped, tag = 'input window, operand 6, single buffered']
    #allocation10 [shape = 'u8[512]{0}', space=vmem, size = 0x400, scoped, tag = 'input window, operand 8, single buffered']
    #allocation11 [shape = 's32[1]{0}', space=sflag, size = 0x4, scoped, tag = 'scoped memory for tpu_custom_call.1']
    #allocation12 [shape = 'u8[4096]{0}', space=vmem, size = 0x1000, scoped, tag = 'output window, operand 0']
    %22 = vsyncpa [#allocation5], 0
    %s23 = scalar_lea.sflag [#allocation5], 1
    %24 = vsyncpa %s23, 0
    %25 = vsyncpa [#allocation8], 0
    %26 = vsyncpa [#allocation11], 0
    %27 = vsyncpa [#allocation6], 0
    %s28 = scalar_lea.sflag [#allocation6], 1
    %29 = vsyncpa %s28, 0
    loop: start=0, step=1, limit=4
    $region2: #{tpu_custom_call.1} parent=1 // loop_pre_header
      _
    $region3: #{tpu_custom_call.1} parent=1 // loop_header
      %s31 = sphi 0, %s35
      %p32 = scmp.ge.s32.totalorder %s31, 4
      %s38 = sphi 0, %s50
      %s39 = sphi 0, %s46
      %s40 = sphi 0, %s38
      %s41 = sphi 0, %s39
      %s42 = sphi 0, %s40
      %s43 = sphi 0, %s41
      %s53 = sphi 0, %s55
      %s56 = sphi 0, %s53
      %s57 = sphi 0, %s56
      %s73 = sphi 0, %s57
      %s79 = sphi 0, %s81
      %s82 = sphi 0, %s79
      %s83 = sphi 0, %s82
      %s99 = sphi 0, %s83
      %s105 = sphi 0, %s107
      %s108 = sphi 0, %s105
      %s109 = sphi 0, %s108
      %s125 = sphi 0, %s109
      %s129 = sphi 0, %s129
      %s131 = sphi 0, %s129
      %s132 = sphi 0, %s131
      %s146 = sphi 0, %s132
      %s150 = sphi 0, %s150
      %s152 = sphi 0, %s150
      %s153 = sphi 0, %s152
      %s167 = sphi 0, %s153
      %s171 = sphi 0, %s171
      %s173 = sphi 0, %s171
      %s174 = sphi 0, %s173
      %s188 = sphi 0, %s174
      %s192 = sphi 0, %s192
      %s194 = sphi 0, %s192
      %s195 = sphi 0, %s194
      %s209 = sphi 0, %s195
      %s213 = sphi 0, %s213
      %s215 = sphi 0, %s213
      %s216 = sphi 0, %s215
      %s230 = sphi 0, %s216
      %s234 = sphi 0, %s234
      %s236 = sphi 0, %s234
      %s237 = sphi 0, %s236
      %s251 = sphi 0, %s237
      %s255 = sphi 0, %s255
      %s257 = sphi 0, %s255
      %s258 = sphi 0, %s257
      %s272 = sphi 0, %s258
      %s276 = sphi 0, %s276
      %s278 = sphi 0, %s276
      %s279 = sphi 0, %s278
      %s293 = sphi 0, %s279
      %s297 = sphi 0, %s297
      %s299 = sphi 0, %s297
      %s300 = sphi 0, %s299
      %s314 = sphi 0, %s300
      %s318 = sphi 0, %s318
      %s320 = sphi 0, %s318
      %s321 = sphi 0, %s320
      %s335 = sphi 0, %s321
      %s339 = sphi 0, %s339
      %s341 = sphi 0, %s339
      %s342 = sphi 0, %s341
      %s356 = sphi 0, %s342
      %s360 = sphi 0, %s360
      %s362 = sphi 0, %s360
      %s363 = sphi 0, %s362
      %s377 = sphi 0, %s363
      %s381 = sphi 0, %s381
      %s383 = sphi 0, %s381
      %s384 = sphi 0, %s383
      %s398 = sphi 0, %s384
      %s402 = sphi 0, %s402
      %s404 = sphi 0, %s402
      %s405 = sphi 0, %s404
      %s419 = sphi 0, %s405
      %s427 = sphi 0, %s429
      %s430 = sphi 0, %s427
      %s431 = sphi 0, %s430
      %s447 = sphi 0, %s431
    $region4: #{tpu_custom_call.1} parent=1 // loop_header_branch
      %34 = sbr.rel (%p32) target = $region8
    $region5: #{tpu_custom_call.1} parent=1 // loop_body
      %s36 = ssub.s32 %s31, 1
      %s37 = ssub.s32 %s31, 2
      %s44 = sadd.s32 1, %s39
      %p45 = scmp.ge.s32.totalorder %s44, 1
      %s46 = scalar_select %p45, 0, %s44
      %s47 = sadd.s32 1, %s38
      %s48 = scalar_select %p45, %s47, %s38
      %p49 = scmp.ge.s32.totalorder %s48, 2
      %s50 = scalar_select %p49, 0, %s48
      %s51 = ssub.s32 %s38, %s50
      %p52 = scmp.eq.s32.totalorder %s51, 0
      %s54 = sadd.s32 %s53, 1
      %s55 = scalar_select %p52, %s53, %s54
      %p58 = pneg %p52
      %p59 = scmp.eq.s32.totalorder %s31, 1
      %p60 = por %p58, %p59
      %p61 = scmp.ne.s32.totalorder %s53, %s56
      %p62 = scmp.eq.s32.totalorder %s31, 0
      %p63 = por %p61, %p62
      %p64 = scmp.ne.s32.totalorder %s53, %s56
      %p65 = scmp.eq.s32.totalorder %s36, 1
      %p66 = por %p64, %p65
      %p67 = scmp.ne.s32.totalorder %s56, %s57
      %p68 = scmp.eq.s32.totalorder %s36, 0
      %p69 = por %p67, %p68
      %p70 = scmp.ne.s32.totalorder %s56, %s57
      %p71 = scmp.eq.s32.totalorder %s37, 1
      %p72 = por %p70, %p71
      %p74 = scmp.ne.s32.totalorder %s57, %s73
      %p75 = scmp.eq.s32.totalorder %s37, 0
      %p76 = por %p74, %p75
      %s77 = ssub.s32 %s38, %s50
      %p78 = scmp.eq.s32.totalorder %s77, 0
      %s80 = sadd.s32 %s79, 1
      %s81 = scalar_select %p78, %s79, %s80
      %p84 = pneg %p78
      %p85 = scmp.eq.s32.totalorder %s31, 1
      %p86 = por %p84, %p85
      %p87 = scmp.ne.s32.totalorder %s79, %s82
      %p88 = scmp.eq.s32.totalorder %s31, 0
      %p89 = por %p87, %p88
      %p90 = scmp.ne.s32.totalorder %s79, %s82
      %p91 = scmp.eq.s32.totalorder %s36, 1
      %p92 = por %p90, %p91
      %p93 = scmp.ne.s32.totalorder %s82, %s83
      %p94 = scmp.eq.s32.totalorder %s36, 0
      %p95 = por %p93, %p94
      %p96 = scmp.ne.s32.totalorder %s82, %s83
      %p97 = scmp.eq.s32.totalorder %s37, 1
      %p98 = por %p96, %p97
      %p100 = scmp.ne.s32.totalorder %s83, %s99
      %p101 = scmp.eq.s32.totalorder %s37, 0
      %p102 = por %p100, %p101
      %s103 = ssub.s32 %s38, %s50
      %p104 = scmp.eq.s32.totalorder %s103, 0
      %s106 = sadd.s32 %s105, 1
      %s107 = scalar_select %p104, %s105, %s106
      %p110 = pneg %p104
      %p111 = scmp.eq.s32.totalorder %s31, 1
      %p112 = por %p110, %p111
      %p113 = scmp.ne.s32.totalorder %s105, %s108
      %p114 = scmp.eq.s32.totalorder %s31, 0
      %p115 = por %p113, %p114
      %p116 = scmp.ne.s32.totalorder %s105, %s108
      %p117 = scmp.eq.s32.totalorder %s36, 1
      %p118 = por %p116, %p117
      %p119 = scmp.ne.s32.totalorder %s108, %s109
      %p120 = scmp.eq.s32.totalorder %s36, 0
      %p121 = por %p119, %p120
      %p122 = scmp.ne.s32.totalorder %s108, %s109
      %p123 = scmp.eq.s32.totalorder %s37, 1
      %p124 = por %p122, %p123
      %p126 = scmp.ne.s32.totalorder %s109, %s125
      %p127 = scmp.eq.s32.totalorder %s37, 0
      %p128 = por %p126, %p127
      %s130 = sadd.s32 %s129, 1
      %p133 = scmp.eq.s32.totalorder %s31, 1
      %p134 = scmp.ne.s32.totalorder %s129, %s131
      %p135 = scmp.eq.s32.totalorder %s31, 0
      %p136 = por %p134, %p135
      %p137 = scmp.ne.s32.totalorder %s129, %s131
      %p138 = scmp.eq.s32.totalorder %s36, 1
      %p139 = por %p137, %p138
      %p140 = scmp.ne.s32.totalorder %s131, %s132
      %p141 = scmp.eq.s32.totalorder %s36, 0
      %p142 = por %p140, %p141
      %p143 = scmp.ne.s32.totalorder %s131, %s132
      %p144 = scmp.eq.s32.totalorder %s37, 1
      %p145 = por %p143, %p144
      %p147 = scmp.ne.s32.totalorder %s132, %s146
      %p148 = scmp.eq.s32.totalorder %s37, 0
      %p149 = por %p147, %p148
      %s151 = sadd.s32 %s150, 1
      %p154 = scmp.eq.s32.totalorder %s31, 1
      %p155 = scmp.ne.s32.totalorder %s150, %s152
      %p156 = scmp.eq.s32.totalorder %s31, 0
      %p157 = por %p155, %p156
      %p158 = scmp.ne.s32.totalorder %s150, %s152
      %p159 = scmp.eq.s32.totalorder %s36, 1
      %p160 = por %p158, %p159
      %p161 = scmp.ne.s32.totalorder %s152, %s153
      %p162 = scmp.eq.s32.totalorder %s36, 0
      %p163 = por %p161, %p162
      %p164 = scmp.ne.s32.totalorder %s152, %s153
      %p165 = scmp.eq.s32.totalorder %s37, 1
      %p166 = por %p164, %p165
      %p168 = scmp.ne.s32.totalorder %s153, %s167
      %p169 = scmp.eq.s32.totalorder %s37, 0
      %p170 = por %p168, %p169
      %s172 = sadd.s32 %s171, 1
      %p175 = scmp.eq.s32.totalorder %s31, 1
      %p176 = scmp.ne.s32.totalorder %s171, %s173
      %p177 = scmp.eq.s32.totalorder %s31, 0
      %p178 = por %p176, %p177
      %p179 = scmp.ne.s32.totalorder %s171, %s173
      %p180 = scmp.eq.s32.totalorder %s36, 1
      %p181 = por %p179, %p180
      %p182 = scmp.ne.s32.totalorder %s173, %s174
      %p183 = scmp.eq.s32.totalorder %s36, 0
      %p184 = por %p182, %p183
      %p185 = scmp.ne.s32.totalorder %s173, %s174
      %p186 = scmp.eq.s32.totalorder %s37, 1
      %p187 = por %p185, %p186
      %p189 = scmp.ne.s32.totalorder %s174, %s188
      %p190 = scmp.eq.s32.totalorder %s37, 0
      %p191 = por %p189, %p190
      %s193 = sadd.s32 %s192, 1
      %p196 = scmp.eq.s32.totalorder %s31, 1
      %p197 = scmp.ne.s32.totalorder %s192, %s194
      %p198 = scmp.eq.s32.totalorder %s31, 0
      %p199 = por %p197, %p198
      %p200 = scmp.ne.s32.totalorder %s192, %s194
      %p201 = scmp.eq.s32.totalorder %s36, 1
      %p202 = por %p200, %p201
      %p203 = scmp.ne.s32.totalorder %s194, %s195
      %p204 = scmp.eq.s32.totalorder %s36, 0
      %p205 = por %p203, %p204
      %p206 = scmp.ne.s32.totalorder %s194, %s195
      %p207 = scmp.eq.s32.totalorder %s37, 1
      %p208 = por %p206, %p207
      %p210 = scmp.ne.s32.totalorder %s195, %s209
      %p211 = scmp.eq.s32.totalorder %s37, 0
      %p212 = por %p210, %p211
      %s214 = sadd.s32 %s213, 1
      %p217 = scmp.eq.s32.totalorder %s31, 1
      %p218 = scmp.ne.s32.totalorder %s213, %s215
      %p219 = scmp.eq.s32.totalorder %s31, 0
      %p220 = por %p218, %p219
      %p221 = scmp.ne.s32.totalorder %s213, %s215
      %p222 = scmp.eq.s32.totalorder %s36, 1
      %p223 = por %p221, %p222
      %p224 = scmp.ne.s32.totalorder %s215, %s216
      %p225 = scmp.eq.s32.totalorder %s36, 0
      %p226 = por %p224, %p225
      %p227 = scmp.ne.s32.totalorder %s215, %s216
      %p228 = scmp.eq.s32.totalorder %s37, 1
      %p229 = por %p227, %p228
      %p231 = scmp.ne.s32.totalorder %s216, %s230
      %p232 = scmp.eq.s32.totalorder %s37, 0
      %p233 = por %p231, %p232
      %s235 = sadd.s32 %s234, 1
      %p238 = scmp.eq.s32.totalorder %s31, 1
      %p239 = scmp.ne.s32.totalorder %s234, %s236
      %p240 = scmp.eq.s32.totalorder %s31, 0
      %p241 = por %p239, %p240
      %p242 = scmp.ne.s32.totalorder %s234, %s236
      %p243 = scmp.eq.s32.totalorder %s36, 1
      %p244 = por %p242, %p243
      %p245 = scmp.ne.s32.totalorder %s236, %s237
      %p246 = scmp.eq.s32.totalorder %s36, 0
      %p247 = por %p245, %p246
      %p248 = scmp.ne.s32.totalorder %s236, %s237
      %p249 = scmp.eq.s32.totalorder %s37, 1
      %p250 = por %p248, %p249
      %p252 = scmp.ne.s32.totalorder %s237, %s251
      %p253 = scmp.eq.s32.totalorder %s37, 0
      %p254 = por %p252, %p253
      %s256 = sadd.s32 %s255, 1
      %p259 = scmp.eq.s32.totalorder %s31, 1
      %p260 = scmp.ne.s32.totalorder %s255, %s257
      %p261 = scmp.eq.s32.totalorder %s31, 0
      %p262 = por %p260, %p261
      %p263 = scmp.ne.s32.totalorder %s255, %s257
      %p264 = scmp.eq.s32.totalorder %s36, 1
      %p265 = por %p263, %p264
      %p266 = scmp.ne.s32.totalorder %s257, %s258
      %p267 = scmp.eq.s32.totalorder %s36, 0
      %p268 = por %p266, %p267
      %p269 = scmp.ne.s32.totalorder %s257, %s258
      %p270 = scmp.eq.s32.totalorder %s37, 1
      %p271 = por %p269, %p270
      %p273 = scmp.ne.s32.totalorder %s258, %s272
      %p274 = scmp.eq.s32.totalorder %s37, 0
      %p275 = por %p273, %p274
      %s277 = sadd.s32 %s276, 1
      %p280 = scmp.eq.s32.totalorder %s31, 1
      %p281 = scmp.ne.s32.totalorder %s276, %s278
      %p282 = scmp.eq.s32.totalorder %s31, 0
      %p283 = por %p281, %p282
      %p284 = scmp.ne.s32.totalorder %s276, %s278
      %p285 = scmp.eq.s32.totalorder %s36, 1
      %p286 = por %p284, %p285
      %p287 = scmp.ne.s32.totalorder %s278, %s279
      %p288 = scmp.eq.s32.totalorder %s36, 0
      %p289 = por %p287, %p288
      %p290 = scmp.ne.s32.totalorder %s278, %s279
      %p291 = scmp.eq.s32.totalorder %s37, 1
      %p292 = por %p290, %p291
      %p294 = scmp.ne.s32.totalorder %s279, %s293
      %p295 = scmp.eq.s32.totalorder %s37, 0
      %p296 = por %p294, %p295
      %s298 = sadd.s32 %s297, 1
      %p301 = scmp.eq.s32.totalorder %s31, 1
      %p302 = scmp.ne.s32.totalorder %s297, %s299
      %p303 = scmp.eq.s32.totalorder %s31, 0
      %p304 = por %p302, %p303
      %p305 = scmp.ne.s32.totalorder %s297, %s299
      %p306 = scmp.eq.s32.totalorder %s36, 1
      %p307 = por %p305, %p306
      %p308 = scmp.ne.s32.totalorder %s299, %s300
      %p309 = scmp.eq.s32.totalorder %s36, 0
      %p310 = por %p308, %p309
      %p311 = scmp.ne.s32.totalorder %s299, %s300
      %p312 = scmp.eq.s32.totalorder %s37, 1
      %p313 = por %p311, %p312
      %p315 = scmp.ne.s32.totalorder %s300, %s314
      %p316 = scmp.eq.s32.totalorder %s37, 0
      %p317 = por %p315, %p316
      %s319 = sadd.s32 %s318, 1
      %p322 = scmp.eq.s32.totalorder %s31, 1
      %p323 = scmp.ne.s32.totalorder %s318, %s320
      %p324 = scmp.eq.s32.totalorder %s31, 0
      %p325 = por %p323, %p324
      %p326 = scmp.ne.s32.totalorder %s318, %s320
      %p327 = scmp.eq.s32.totalorder %s36, 1
      %p328 = por %p326, %p327
      %p329 = scmp.ne.s32.totalorder %s320, %s321
      %p330 = scmp.eq.s32.totalorder %s36, 0
      %p331 = por %p329, %p330
      %p332 = scmp.ne.s32.totalorder %s320, %s321
      %p333 = scmp.eq.s32.totalorder %s37, 1
      %p334 = por %p332, %p333
      %p336 = scmp.ne.s32.totalorder %s321, %s335
      %p337 = scmp.eq.s32.totalorder %s37, 0
      %p338 = por %p336, %p337
      %s340 = sadd.s32 %s339, 1
      %p343 = scmp.eq.s32.totalorder %s31, 1
      %p344 = scmp.ne.s32.totalorder %s339, %s341
      %p345 = scmp.eq.s32.totalorder %s31, 0
      %p346 = por %p344, %p345
      %p347 = scmp.ne.s32.totalorder %s339, %s341
      %p348 = scmp.eq.s32.totalorder %s36, 1
      %p349 = por %p347, %p348
      %p350 = scmp.ne.s32.totalorder %s341, %s342
      %p351 = scmp.eq.s32.totalorder %s36, 0
      %p352 = por %p350, %p351
      %p353 = scmp.ne.s32.totalorder %s341, %s342
      %p354 = scmp.eq.s32.totalorder %s37, 1
      %p355 = por %p353, %p354
      %p357 = scmp.ne.s32.totalorder %s342, %s356
      %p358 = scmp.eq.s32.totalorder %s37, 0
      %p359 = por %p357, %p358
      %s361 = sadd.s32 %s360, 1
      %p364 = scmp.eq.s32.totalorder %s31, 1
      %p365 = scmp.ne.s32.totalorder %s360, %s362
      %p366 = scmp.eq.s32.totalorder %s31, 0
      %p367 = por %p365, %p366
      %p368 = scmp.ne.s32.totalorder %s360, %s362
      %p369 = scmp.eq.s32.totalorder %s36, 1
      %p370 = por %p368, %p369
      %p371 = scmp.ne.s32.totalorder %s362, %s363
      %p372 = scmp.eq.s32.totalorder %s36, 0
      %p373 = por %p371, %p372
      %p374 = scmp.ne.s32.totalorder %s362, %s363
      %p375 = scmp.eq.s32.totalorder %s37, 1
      %p376 = por %p374, %p375
      %p378 = scmp.ne.s32.totalorder %s363, %s377
      %p379 = scmp.eq.s32.totalorder %s37, 0
      %p380 = por %p378, %p379
      %s382 = sadd.s32 %s381, 1
      %p385 = scmp.eq.s32.totalorder %s31, 1
      %p386 = scmp.ne.s32.totalorder %s381, %s383
      %p387 = scmp.eq.s32.totalorder %s31, 0
      %p388 = por %p386, %p387
      %p389 = scmp.ne.s32.totalorder %s381, %s383
      %p390 = scmp.eq.s32.totalorder %s36, 1
      %p391 = por %p389, %p390
      %p392 = scmp.ne.s32.totalorder %s383, %s384
      %p393 = scmp.eq.s32.totalorder %s36, 0
      %p394 = por %p392, %p393
      %p395 = scmp.ne.s32.totalorder %s383, %s384
      %p396 = scmp.eq.s32.totalorder %s37, 1
      %p397 = por %p395, %p396
      %p399 = scmp.ne.s32.totalorder %s384, %s398
      %p400 = scmp.eq.s32.totalorder %s37, 0
      %p401 = por %p399, %p400
      %s403 = sadd.s32 %s402, 1
      %p406 = scmp.eq.s32.totalorder %s31, 1
      %p407 = scmp.ne.s32.totalorder %s402, %s404
      %p408 = scmp.eq.s32.totalorder %s31, 0
      %p409 = por %p407, %p408
      %p410 = scmp.ne.s32.totalorder %s402, %s404
      %p411 = scmp.eq.s32.totalorder %s36, 1
      %p412 = por %p410, %p411
      %p413 = scmp.ne.s32.totalorder %s404, %s405
      %p414 = scmp.eq.s32.totalorder %s36, 0
      %p415 = por %p413, %p414
      %p416 = scmp.ne.s32.totalorder %s404, %s405
      %p417 = scmp.eq.s32.totalorder %s37, 1
      %p418 = por %p416, %p417
      %p420 = scmp.ne.s32.totalorder %s405, %s419
      %p421 = scmp.eq.s32.totalorder %s37, 0
      %p422 = por %p420, %p421
      %s423 = ssub.s32 %s38, %s50
      %s424 = ssub.s32 %s39, %s46
      %s425 = sor.u32 %s423, %s424
      %p426 = scmp.eq.s32.totalorder %s425, 0
      %s428 = sadd.s32 %s427, 1
      %s429 = scalar_select %p426, %s427, %s428
      %p432 = pneg %p426
      %p433 = scmp.eq.s32.totalorder %s31, 1
      %p434 = por %p432, %p433
      %p435 = scmp.ne.s32.totalorder %s427, %s430
      %p436 = scmp.eq.s32.totalorder %s31, 0
      %p437 = por %p435, %p436
      %p438 = scmp.ne.s32.totalorder %s427, %s430
      %p439 = scmp.eq.s32.totalorder %s36, 1
      %p440 = por %p438, %p439
      %p441 = scmp.ne.s32.totalorder %s430, %s431
      %p442 = scmp.eq.s32.totalorder %s36, 0
      %p443 = por %p441, %p442
      %p444 = scmp.ne.s32.totalorder %s430, %s431
      %p445 = scmp.eq.s32.totalorder %s37, 1
      %p446 = por %p444, %p445
      %p448 = scmp.ne.s32.totalorder %s431, %s447
      %p449 = scmp.eq.s32.totalorder %s37, 0
      %p450 = por %p448, %p449
      %p451 = scmp.le.s32.totalorder 1, %s31
      %p452 = scmp.lt.s32.totalorder %s31, 3
      %p453 = pnand %p451, %p452
      %p454 = pneg %p453
      // Predicated region
      $region9: #{tpu_custom_call.1} parent=5 // pred_check
        _
      $region10: #{tpu_custom_call.1} parent=5 // pred_check_branch
        %456 = sbr.rel (%p453) target = $region12
      $region11: #{tpu_custom_call.1} parent=5 // pred_region
        %s457 = ssub.s32 %s31, 1
        // Predicated region
        $region13: #{tpu_custom_call.1} parent=11 // pred_check
          %p458 = pneg %p142
        $region14: #{tpu_custom_call.1} parent=11 // pred_check_branch
          %460 = sbr.rel (%p458) target = $region16
        $region15: #{tpu_custom_call.1} parent=11 // pred_region
          _
        $region16: #{tpu_custom_call.1} parent=11 // pred_fallthru
          _
        // Predicated region
        $region17: #{tpu_custom_call.1} parent=11 // pred_check
          %p461 = pneg %p163
        $region18: #{tpu_custom_call.1} parent=11 // pred_check_branch
          %463 = sbr.rel (%p461) target = $region20
        $region19: #{tpu_custom_call.1} parent=11 // pred_region
          %s465 = ssub.s32 16, 16
          %466 = vsyncadd [#allocation8], %s465
          %s468 = sshll.u32 [#allocation7], 4
          %s469 = int_to_ptr.vmem [resolvable:$true] %s468
          %471 = dma.hbm_to_vmem [thread:$0]  %s4, 16, %s469, [#allocation8]
        $region20: #{tpu_custom_call.1} parent=11 // pred_fallthru
          _
        // Predicated region
        $region21: #{tpu_custom_call.1} parent=11 // pred_check
          %p472 = pneg %p184
        $region22: #{tpu_custom_call.1} parent=11 // pred_check_branch
          %474 = sbr.rel (%p472) target = $region24
        $region23: #{tpu_custom_call.1} parent=11 // pred_region
          _
        $region24: #{tpu_custom_call.1} parent=11 // pred_fallthru
          _
        // Predicated region
        $region25: #{tpu_custom_call.1} parent=11 // pred_check
          %p475 = pneg %p205
        $region26: #{tpu_custom_call.1} parent=11 // pred_check_branch
          %477 = sbr.rel (%p475) target = $region28
        $region27: #{tpu_custom_call.1} parent=11 // pred_region
          %s479 = ssub.s32 16, 16
          %480 = vsyncadd [#allocation8], %s479
          %s482 = sshll.u32 [#allocation9], 4
          %s483 = int_to_ptr.vmem [resolvable:$true] %s482
          %485 = dma.hbm_to_vmem [thread:$0]  %s6, 16, %s483, [#allocation8]
        $region28: #{tpu_custom_call.1} parent=11 // pred_fallthru
          _
        // Predicated region
        $region29: #{tpu_custom_call.1} parent=11 // pred_check
          %p486 = pneg %p226
        $region30: #{tpu_custom_call.1} parent=11 // pred_check_branch
          %488 = sbr.rel (%p486) target = $region32
        $region31: #{tpu_custom_call.1} parent=11 // pred_region
          _
        $region32: #{tpu_custom_call.1} parent=11 // pred_fallthru
          _
        // Predicated region
        $region33: #{tpu_custom_call.1} parent=11 // pred_check
          %p489 = pneg %p247
        $region34: #{tpu_custom_call.1} parent=11 // pred_check_branch
          %491 = sbr.rel (%p489) target = $region36
        $region35: #{tpu_custom_call.1} parent=11 // pred_region
          %s493 = ssub.s32 16, 16
          %494 = vsyncadd [#allocation11], %s493
          %s496 = sshll.u32 [#allocation10], 4
          %s497 = int_to_ptr.vmem [resolvable:$true] %s496
          %499 = dma.hbm_to_vmem [thread:$0]  %s8, 16, %s497, [#allocation11]
        $region36: #{tpu_custom_call.1} parent=11 // pred_fallthru
          _
        // Predicated region
        $region37: #{tpu_custom_call.1} parent=11 // pred_check
          %p500 = pneg %p268
        $region38: #{tpu_custom_call.1} parent=11 // pred_check_branch
          %502 = sbr.rel (%p500) target = $region40
        $region39: #{tpu_custom_call.1} parent=11 // pred_region
          _
        $region40: #{tpu_custom_call.1} parent=11 // pred_fallthru
          _
        // Predicated region
        $region41: #{tpu_custom_call.1} parent=11 // pred_check
          %p503 = pneg %p289
        $region42: #{tpu_custom_call.1} parent=11 // pred_check_branch
          %505 = sbr.rel (%p503) target = $region44
        $region43: #{tpu_custom_call.1} parent=11 // pred_region
          _
        $region44: #{tpu_custom_call.1} parent=11 // pred_fallthru
          _
        // Predicated region
        $region45: #{tpu_custom_call.1} parent=11 // pred_check
          %p506 = pneg %p310
        $region46: #{tpu_custom_call.1} parent=11 // pred_check_branch
          %508 = sbr.rel (%p506) target = $region48
        $region47: #{tpu_custom_call.1} parent=11 // pred_region
          _
        $region48: #{tpu_custom_call.1} parent=11 // pred_fallthru
          _
        // Predicated region
        $region49: #{tpu_custom_call.1} parent=11 // pred_check
          %p509 = pneg %p331
        $region50: #{tpu_custom_call.1} parent=11 // pred_check_branch
          %511 = sbr.rel (%p509) target = $region52
        $region51: #{tpu_custom_call.1} parent=11 // pred_region
          _
        $region52: #{tpu_custom_call.1} parent=11 // pred_fallthru
          _
        // Predicated region
        $region53: #{tpu_custom_call.1} parent=11 // pred_check
          %p512 = pneg %p352
        $region54: #{tpu_custom_call.1} parent=11 // pred_check_branch
          %514 = sbr.rel (%p512) target = $region56
        $region55: #{tpu_custom_call.1} parent=11 // pred_region
          _
        $region56: #{tpu_custom_call.1} parent=11 // pred_fallthru
          _
        // Predicated region
        $region57: #{tpu_custom_call.1} parent=11 // pred_check
          %p515 = pneg %p373
        $region58: #{tpu_custom_call.1} parent=11 // pred_check_branch
          %517 = sbr.rel (%p515) target = $region60
        $region59: #{tpu_custom_call.1} parent=11 // pred_region
          _
        $region60: #{tpu_custom_call.1} parent=11 // pred_fallthru
          _
        // Predicated region
        $region61: #{tpu_custom_call.1} parent=11 // pred_check
          %p518 = pneg %p394
        $region62: #{tpu_custom_call.1} parent=11 // pred_check_branch
          %520 = sbr.rel (%p518) target = $region64
        $region63: #{tpu_custom_call.1} parent=11 // pred_region
          _
        $region64: #{tpu_custom_call.1} parent=11 // pred_fallthru
          _
        // Predicated region
        $region65: #{tpu_custom_call.1} parent=11 // pred_check
          %p521 = pneg %p415
        $region66: #{tpu_custom_call.1} parent=11 // pred_check_branch
          %523 = sbr.rel (%p521) target = $region68
        $region67: #{tpu_custom_call.1} parent=11 // pred_region
          _
        $region68: #{tpu_custom_call.1} parent=11 // pred_fallthru
          _
      $region12: #{tpu_custom_call.1} parent=5 // pred_fallthru
        _
      %p524 = scmp.lt.s32.totalorder %s31, 2
      // Predicated region
      $region69: #{tpu_custom_call.1} parent=5 // pred_check
        %p525 = pneg %p524
      $region70: #{tpu_custom_call.1} parent=5 // pred_check_branch
        %527 = sbr.rel (%p525) target = $region72
      $region71: #{tpu_custom_call.1} parent=5 // pred_region
        // Predicated region
        $region73: #{tpu_custom_call.1} parent=71 // pred_check
          %p528 = pneg %p63
        $region74: #{tpu_custom_call.1} parent=71 // pred_check_branch
          %530 = sbr.rel (%p528) target = $region76
        $region75: #{tpu_custom_call.1} parent=71 // pred_region
          %s531 = sand.u32 %s53, 1
          %s532 = scalar_lea.sflag [#allocation5], %s531
          %s533 = sand.u32 %s53, 1
          %s534 = smul.addr %s533, 4
          %s535 = scalar_lea.vmem [#allocation4], %s534
          %s537 = ssub.s32 64, 64
          %538 = vsyncadd %s532, %s537
          %s539 = smul.addr %s38, 64
          %s540 = scalar_lea.hbm %s0, %s539
          %s542 = sshll.u32 %s535, 4
          %s543 = int_to_ptr.vmem [resolvable:$true] %s542
          %545 = dma.hbm_to_vmem [thread:$0]  %s540, 64, %s543, %s532
        $region76: #{tpu_custom_call.1} parent=71 // pred_fallthru
          _
        // Predicated region
        $region77: #{tpu_custom_call.1} parent=71 // pred_check
          %p546 = pneg %p89
        $region78: #{tpu_custom_call.1} parent=71 // pred_check_branch
          %548 = sbr.rel (%p546) target = $region80
        $region79: #{tpu_custom_call.1} parent=71 // pred_region
          %p549 = scmp.lt.s32.totalorder %s38, 1
          %s550 = scalar_select %p549, %s38, 1
          %s551 = scalar_lea.vmem %s1, %s550
        $region80: #{tpu_custom_call.1} parent=71 // pred_fallthru
          _
        // Predicated region
        $region81: #{tpu_custom_call.1} parent=71 // pred_check
          %p552 = pneg %p115
        $region82: #{tpu_custom_call.1} parent=71 // pred_check_branch
          %554 = sbr.rel (%p552) target = $region84
        $region83: #{tpu_custom_call.1} parent=71 // pred_region
          %p555 = scmp.lt.s32.totalorder %s38, 1
          %s556 = scalar_select %p555, %s38, 1
          %s557 = scalar_lea.vmem %s2, %s556
        $region84: #{tpu_custom_call.1} parent=71 // pred_fallthru
          _
      $region72: #{tpu_custom_call.1} parent=5 // pred_fallthru
        _
      %p558 = scmp.le.s32.totalorder 1, %s31
      %p559 = scmp.lt.s32.totalorder %s31, 3
      %p560 = pnand %p558, %p559
      %p561 = pneg %p560
      // Predicated region
      $region85: #{tpu_custom_call.1} parent=5 // pred_check
        _
      $region86: #{tpu_custom_call.1} parent=5 // pred_check_branch
        %563 = sbr.rel (%p560) target = $region88
      $region87: #{tpu_custom_call.1} parent=5 // pred_region
        %s564 = ssub.s32 %s31, 1
        %s565 = sand.u32 %s56, 1
        %s566 = scalar_lea.sflag [#allocation5], %s565
        %s567 = sand.u32 %s56, 1
        %s568 = smul.addr %s567, 4
        %s569 = scalar_lea.vmem [#allocation4], %s568
        // Predicated region
        $region89: #{tpu_custom_call.1} parent=87 // pred_check
          %p570 = pneg %p69
        $region90: #{tpu_custom_call.1} parent=87 // pred_check_branch
          %572 = sbr.rel (%p570) target = $region92
        $region91: #{tpu_custom_call.1} parent=87 // pred_region
          %573 = dma.done %s566, 64
        $region92: #{tpu_custom_call.1} parent=87 // pred_fallthru
          _
        // Predicated region
        $region93: #{tpu_custom_call.1} parent=87 // pred_check
          %p574 = pneg %p163
        $region94: #{tpu_custom_call.1} parent=87 // pred_check_branch
          %576 = sbr.rel (%p574) target = $region96
        $region95: #{tpu_custom_call.1} parent=87 // pred_region
          %577 = dma.done [#allocation8], 16
        $region96: #{tpu_custom_call.1} parent=87 // pred_fallthru
          _
        // Predicated region
        $region97: #{tpu_custom_call.1} parent=87 // pred_check
          %p578 = pneg %p205
        $region98: #{tpu_custom_call.1} parent=87 // pred_check_branch
          %580 = sbr.rel (%p578) target = $region100
        $region99: #{tpu_custom_call.1} parent=87 // pred_region
          %581 = dma.done [#allocation8], 16
        $region100: #{tpu_custom_call.1} parent=87 // pred_fallthru
          _
        // Predicated region
        $region101: #{tpu_custom_call.1} parent=87 // pred_check
          %p582 = pneg %p247
        $region102: #{tpu_custom_call.1} parent=87 // pred_check_branch
          %584 = sbr.rel (%p582) target = $region104
        $region103: #{tpu_custom_call.1} parent=87 // pred_region
          %585 = dma.done [#allocation11], 16
        $region104: #{tpu_custom_call.1} parent=87 // pred_fallthru
          _
        %s586 = sand.u32 %s56, 1
        %s587 = scalar_lea.sflag [#allocation5], %s586
        %s588 = sand.u32 %s56, 1
        %s589 = smul.addr %s588, 4
        %s590 = scalar_lea.vmem [#allocation4], %s589
        %p591 = pneg %p69
        %p592 = pneg %p66
        %p593 = scmp.lt.s32.totalorder %s40, 1
        %s594 = scalar_select %p593, %s40, 1
        %s595 = scalar_lea.vmem %s1, %s594
        %p596 = pneg %p95
        %p597 = pneg %p92
        %p598 = scmp.lt.s32.totalorder %s40, 1
        %s599 = scalar_select %p598, %s40, 1
        %s600 = scalar_lea.vmem %s2, %s599
        %p601 = pneg %p121
        %p602 = pneg %p118
        %p603 = pneg %p142
        %p604 = pneg %p139
        %p605 = pneg %p163
        %p606 = pneg %p160
        %p607 = pneg %p184
        %p608 = pneg %p181
        %p609 = pneg %p205
        %p610 = pneg %p202
        %p611 = pneg %p226
        %p612 = pneg %p223
        %p613 = pneg %p247
        %p614 = pneg %p244
        %p615 = pneg %p268
        %p616 = pneg %p265
        %p617 = pneg %p289
        %p618 = pneg %p286
        %p619 = pneg %p310
        %p620 = pneg %p307
        %p621 = pneg %p331
        %p622 = pneg %p328
        %p623 = pneg %p352
        %p624 = pneg %p349
        %p625 = pneg %p373
        %p626 = pneg %p370
        %p627 = pneg %p394
        %p628 = pneg %p391
        %p629 = pneg %p415
        %p630 = pneg %p412
        %p631 = pneg %p443
        %p632 = pneg %p440
        %s633 = sand.u32 %s430, 1
        %s634 = scalar_lea.sflag [#allocation6], %s633
        %s635 = sand.u32 %s430, 1
        %s636 = smul.addr %s635, 4
        %s637 = scalar_lea.vmem [#allocation12], %s636
        %p638 = scmp.lt.s32.totalorder %s40, 1
        %s639 = scalar_select %p638, %s40, 1
        %s640 = scalar_lea.vmem %s1, %s639
        %p641 = scmp.lt.s32.totalorder %s40, 1
        %s642 = scalar_select %p641, %s40, 1
        %s643 = scalar_lea.vmem %s2, %s642
        %p645 = scmp.eq.s32.totalorder %s41, 0
        // Predicated region
        $region105: #{tpu_custom_call.1} parent=87 // pred_check
          %p646 = pneg %p645
        $region106: #{tpu_custom_call.1} parent=87 // pred_check_branch
          %648 = sbr.rel (%p646) target = $region108
        $region107: #{tpu_custom_call.1} parent=87 // pred_region
          %v649 = vld [vmem:[%s569] sm:$0xf]
          %v650 = vld [vmem:[%s5] sm:$0xf]
          %v651 = vld [vmem:[%s5 + $0x4] sm:$0xf]
          %v652 = vld [vmem:[%s5 + $0x8] sm:$0xf]
          %v653 = vld [vmem:[%s5 + $0xc] sm:$0xf]
          %v654 = vld [vmem:[#allocation9] sm:$0x1]
          %v656 = vlaneseq
          %v657 = vshrl.u32 %v656, 7
          %v658 = vsub.s32 0, %v657
          %v659 = vrot.slane %v654, %v658
          %v665 = vunpack.c.l.b16 %v650
          %v666 = vunpack.c.l.b16 %v651
          %v667 = vunpack.c.l.b16 %v652
          %v668 = vunpack.c.l.b16 %v653
          %v669 = vpack.c.b16 %v666, %v665
          %v670 = vpack.c.b16 %v668, %v667
          %vm673 = vcmask 261120
          %v675 = vsel %vm673, %v649, 0
          %677 = vmatprep.subr.bf16.mxu0 0
          %678 = vmatpush1.bf16.msra.mxu0 %v669
          %679 = vmatprep.subr.bf16.mxu0 0
          %680 = vmatpush1.bf16.msra.mxu0 %v670
          %681 = vmatprep.subr.bf16.mxu0 0
          %682 = vmatpush1.bf16.msra.mxu0 0
          %683 = vmatprep.subr.bf16.mxu0 0
          %684 = vmatpush1.bf16.msra.mxu0 0
          %685 = vmatprep.subr.bf16.mxu0 0
          %686 = vmatpush1.bf16.msra.mxu0 0
          %687 = vmatprep.subr.bf16.mxu0 0
          %688 = vmatpush1.bf16.msra.mxu0 0
          %689 = vmatprep.subr.bf16.mxu0 0
          %690 = vmatpush1.bf16.msra.mxu0 0
          %691 = vmatprep.subr.bf16.mxu0 0
          %692 = vmatpush1.bf16.msra.mxu0 0
          %693 = vmatprep.subr.bf16.mxu0 0
          %694 = vmatpush1.bf16.msra.mxu0 0
          %695 = vmatprep.subr.bf16.mxu0 0
          %696 = vmatpush1.bf16.msra.mxu0 0
          %697 = vmatprep.subr.bf16.mxu0 0
          %698 = vmatpush1.bf16.msra.mxu0 0
          %699 = vmatprep.subr.bf16.mxu0 0
          %700 = vmatpush1.bf16.msra.mxu0 0
          %701 = vmatprep.subr.bf16.mxu0 0
          %702 = vmatpush1.bf16.msra.mxu0 0
          %703 = vmatprep.subr.bf16.mxu0 0
          %704 = vmatpush1.bf16.msra.mxu0 0
          %705 = vmatprep.subr.bf16.mxu0 0
          %706 = vmatpush1.bf16.msra.mxu0 0
          %707 = vmatprep.subr.bf16.mxu0 0
          %708 = vmatpush1.bf16.msra.mxu0 0
          %709 = vmatprep.mubr.bf16.mxu0 0
          %710 = vmatmul.mubr.bf16.gmra.mrb[0].mxu0 %v675
          %v711 = vpop.f32.mrb[0].mxu0
          %v712 = vadd.f32 %v659, %v711
          %v713 = vpop.f32.mrb[0].mxu0
          %v714 = vpop.f32.mrb[0].mxu0
          %v715 = vpop.f32.mrb[0].mxu0
          %716 = vdwg.mxu0
          %v717 = vpack.c.bf16 %v712, %v712
          %vm718 = vcmask 60416
          %719 = vst.msk [vmem:[#allocation2] sm:$0xf] %vm718, %v717
          %v721 = vunpack.c.l.b16 %v717
          %v722 = vpack.c.b16 %v721, %v721
          %723 = vrot.lane.b32.xlu0 %v722, 96
          %v724 = vpop.permute.xlu0 %723
          %726 = vst.msk [vmem:[#allocation3] sm:$0xf] %vm718, %v724
          %727 = vrot.lane.b32.xlu0 %v722, 120
          %v728 = vpop.permute.xlu0 %727
          %s730 = scalar_lea.vmem [#allocation2], 4
          %731 = vst.msk [vmem:[%s730] sm:$0xf] %vm718, %v728
          %732 = vrot.lane.b32.xlu0 %v722, 88
          %v733 = vpop.permute.xlu0 %732
          %s735 = scalar_lea.vmem [#allocation3], 4
          %736 = vst.msk [vmem:[%s735] sm:$0xf] %vm718, %v733
          %737 = vrot.lane.b32.xlu0 %v722, 112
          %v738 = vpop.permute.xlu0 %737
          %s740 = scalar_lea.vmem [#allocation2], 8
          %741 = vst.msk [vmem:[%s740] sm:$0xf] %vm718, %v738
          %742 = vrot.lane.b32.xlu0 %v722, 80
          %v743 = vpop.permute.xlu0 %742
          %s745 = scalar_lea.vmem [#allocation3], 8
          %746 = vst.msk [vmem:[%s745] sm:$0xf] %vm718, %v743
          %747 = vrot.lane.b32.xlu0 %v722, 104
          %v748 = vpop.permute.xlu0 %747
          %s750 = scalar_lea.vmem [#allocation2], 12
          %751 = vst.msk [vmem:[%s750] sm:$0xf] %vm718, %v748
          %752 = vrot.lane.b32.xlu0 %v722, 72
          %v753 = vpop.permute.xlu0 %752
          %s755 = scalar_lea.vmem [#allocation3], 12
          %756 = vst.msk [vmem:[%s755] sm:$0xf] %vm718, %v753
        $region108: #{tpu_custom_call.1} parent=87 // pred_fallthru
          _
        %s757 = smul.u32 %s41, 8
        %s758 = sshra.s32 %s757, 3
        %s759 = sand.u32 %s757, 7
        %s760 = smul.addr %s758, 4
        %s761 = scalar_lea.vmem %s569, %s760 [#allocation4]
        %v762 = vld [vmem:[%s761] sm:$0xf]
        %v763 = vunpack.c.l.bf16 %v762
        %v764 = vld [vmem:[%s3] sm:$0xf]
        %v765 = vld [vmem:[%s3 + $0x4] sm:$0xf]
        %v766 = vld [vmem:[%s3 + $0x8] sm:$0xf]
        %v767 = vld [vmem:[%s3 + $0xc] sm:$0xf]
        %v768 = vld [vmem:[#allocation7] sm:$0x1]
        %v770 = vlaneseq
        %v771 = vshrl.u32 %v770, 7
        %v772 = vsub.s32 0, %v771
        %v773 = vrot.slane %v768, %v772
        %v779 = vunpack.c.l.b16 %v764
        %v780 = vunpack.c.l.b16 %v765
        %v781 = vunpack.c.l.b16 %v766
        %v782 = vunpack.c.l.b16 %v767
        %v783 = vpack.c.b16 %v780, %v779
        %v784 = vpack.c.b16 %v782, %v781
        %vm787 = vcmask 261120
        %v789 = vsel %vm787, %v762, 0
        %791 = vmatprep.subr.bf16.mxu0 0
        %792 = vmatpush1.bf16.msra.mxu0 %v783
        %793 = vmatprep.subr.bf16.mxu0 0
        %794 = vmatpush1.bf16.msra.mxu0 %v784
        %795 = vmatprep.subr.bf16.mxu0 0
        %796 = vmatpush1.bf16.msra.mxu0 0
        %797 = vmatprep.subr.bf16.mxu0 0
        %798 = vmatpush1.bf16.msra.mxu0 0
        %799 = vmatprep.subr.bf16.mxu0 0
        %800 = vmatpush1.bf16.msra.mxu0 0
        %801 = vmatprep.subr.bf16.mxu0 0
        %802 = vmatpush1.bf16.msra.mxu0 0
        %803 = vmatprep.subr.bf16.mxu0 0
        %804 = vmatpush1.bf16.msra.mxu0 0
        %805 = vmatprep.subr.bf16.mxu0 0
        %806 = vmatpush1.bf16.msra.mxu0 0
        %807 = vmatprep.subr.bf16.mxu0 0
        %808 = vmatpush1.bf16.msra.mxu0 0
        %809 = vmatprep.subr.bf16.mxu0 0
        %810 = vmatpush1.bf16.msra.mxu0 0
        %811 = vmatprep.subr.bf16.mxu0 0
        %812 = vmatpush1.bf16.msra.mxu0 0
        %813 = vmatprep.subr.bf16.mxu0 0
        %814 = vmatpush1.bf16.msra.mxu0 0
        %815 = vmatprep.subr.bf16.mxu0 0
        %816 = vmatpush1.bf16.msra.mxu0 0
        %817 = vmatprep.subr.bf16.mxu0 0
        %818 = vmatpush1.bf16.msra.mxu0 0
        %819 = vmatprep.subr.bf16.mxu0 0
        %820 = vmatpush1.bf16.msra.mxu0 0
        %821 = vmatprep.subr.bf16.mxu0 0
        %822 = vmatpush1.bf16.msra.mxu0 0
        %823 = vmatprep.mubr.bf16.mxu0 0
        %824 = vmatmul.mubr.bf16.gmra.mrb[0].mxu0 %v789
        %v825 = vpop.f32.mrb[0].mxu0
        %v826 = vadd.f32 %v773, %v825
        %v827 = vpop.f32.mrb[0].mxu0
        %v828 = vpop.f32.mrb[0].mxu0
        %v829 = vpop.f32.mrb[0].mxu0
        %830 = vdwg.mxu0
        // Predicated region
        $region109: #{tpu_custom_call.1} parent=87 // pred_check
          %p831 = pneg %p645
        $region110: #{tpu_custom_call.1} parent=87 // pred_check_branch
          %833 = sbr.rel (%p831) target = $region112
        $region111: #{tpu_custom_call.1} parent=87 // pred_region
          %v834 = vld [vmem:[%s643] sm:$0x1]
          %v835 = vld [vmem:[%s3] sm:$0xf]
          %v836 = vld [vmem:[%s3 + $0x4] sm:$0xf]
          %v837 = vld [vmem:[%s3 + $0x8] sm:$0xf]
          %v838 = vld [vmem:[%s3 + $0xc] sm:$0xf]
          %v839 = vld [vmem:[#allocation7] sm:$0x1]
          %v844 = vunpack.c.l.b16 %v835
          %v845 = vunpack.c.l.b16 %v836
          %v846 = vunpack.c.l.b16 %v837
          %v847 = vunpack.c.l.b16 %v838
          %v848 = vpack.c.b16 %v845, %v844
          %v849 = vpack.c.b16 %v847, %v846
          %v853 = vsel %vm787, %v834, 0
          %855 = vmatprep.subr.bf16.mxu0 0
          %856 = vmatpush1.bf16.msra.mxu0 %v848
          %857 = vmatprep.subr.bf16.mxu0 0
          %858 = vmatpush1.bf16.msra.mxu0 %v849
          %859 = vmatprep.subr.bf16.mxu0 0
          %860 = vmatpush1.bf16.msra.mxu0 0
          %861 = vmatprep.subr.bf16.mxu0 0
          %862 = vmatpush1.bf16.msra.mxu0 0
          %863 = vmatprep.subr.bf16.mxu0 0
          %864 = vmatpush1.bf16.msra.mxu0 0
          %865 = vmatprep.subr.bf16.mxu0 0
          %866 = vmatpush1.bf16.msra.mxu0 0
          %867 = vmatprep.subr.bf16.mxu0 0
          %868 = vmatpush1.bf16.msra.mxu0 0
          %869 = vmatprep.subr.bf16.mxu0 0
          %870 = vmatpush1.bf16.msra.mxu0 0
          %871 = vmatprep.subr.bf16.mxu0 0
          %872 = vmatpush1.bf16.msra.mxu0 0
          %873 = vmatprep.subr.bf16.mxu0 0
          %874 = vmatpush1.bf16.msra.mxu0 0
          %875 = vmatprep.subr.bf16.mxu0 0
          %876 = vmatpush1.bf16.msra.mxu0 0
          %877 = vmatprep.subr.bf16.mxu0 0
          %878 = vmatpush1.bf16.msra.mxu0 0
          %879 = vmatprep.subr.bf16.mxu0 0
          %880 = vmatpush1.bf16.msra.mxu0 0
          %881 = vmatprep.subr.bf16.mxu0 0
          %882 = vmatpush1.bf16.msra.mxu0 0
          %883 = vmatprep.subr.bf16.mxu0 0
          %884 = vmatpush1.bf16.msra.mxu0 0
          %885 = vmatprep.subr.bf16.mxu0 0
          %886 = vmatpush1.bf16.msra.mxu0 0
          %887 = vmatprep.mubr.bf16.mxu0 0
          %888 = vmatmul.mubr.bf16.gmra.mrb[0].mxu0 %v853
          %v889 = vpop.f32.mrb[0].mxu0
          %v890 = vadd.f32 %v839, %v889
          %v891 = vpop.f32.mrb[0].mxu0
          %v892 = vpop.f32.mrb[0].mxu0
          %v893 = vpop.f32.mrb[0].mxu0
          %894 = vdwg.mxu0
          %v895 = vlaneseq
          %v896 = vshrl.u32 %v895, 7
          %vm897 = vcmp.eq.s32.totalorder %v896, 1
          %v898 = vsel %vm897, 1, 0
          %vm899 = vcmp.eq.s32.totalorder %v898, 1
          %v900 = vlaneseq
          %v901 = vshrl.u32 %v900, 7
          %v902 = vsub.s32 0, %v901
          %v903 = vrot.slane %v890, %v902
          %v904 = vsel %vm899, %v903, %v826
        $region112: #{tpu_custom_call.1} parent=87 // pred_fallthru
          %v905 = vphi 0, %v904
        %p906 = pneg %p645
        // Predicated region
        $region113: #{tpu_custom_call.1} parent=87 // pred_check
          _
        $region114: #{tpu_custom_call.1} parent=87 // pred_check_branch
          %908 = sbr.rel (%p645) target = $region116
        $region115: #{tpu_custom_call.1} parent=87 // pred_region
          _
        $region116: #{tpu_custom_call.1} parent=87 // pred_fallthru
          %v909 = vphi %v905, %v826
        %v910 = vpack.c.bf16 %v909, %v909
        %v911 = vld [vmem:[%s640] sm:$0x1]
        %v912 = vld [vmem:[#allocation2] sm:$0xf]
        %v914 = vlaneseq
        %v915 = vshrl.u32 %v914, 7
        %v916 = vsub.s32 0, %v915
        %v917 = vrot.slane %v911, %v916
        %vm919 = vcmask 64512
        %v921 = vsel %vm919, %v910, 0
        %v924 = vsel %vm919, %v912, 0
        %926 = vmatprep.subr.bf16.mxu0 0
        %927 = vmatpush1.bf16.xpose.msra.mxu0 %v924
        %928 = vmatprep.subr.bf16.mxu0 0
        %929 = vmatpush1.bf16.xpose.msra.mxu0 0
        %930 = vmatprep.subr.bf16.mxu0 0
        %931 = vmatpush1.bf16.xpose.msra.mxu0 0
        %932 = vmatprep.subr.bf16.mxu0 0
        %933 = vmatpush1.bf16.xpose.msra.mxu0 0
        %934 = vmatprep.subr.bf16.mxu0 0
        %935 = vmatpush1.bf16.xpose.msra.mxu0 0
        %936 = vmatprep.subr.bf16.mxu0 0
        %937 = vmatpush1.bf16.xpose.msra.mxu0 0
        %938 = vmatprep.subr.bf16.mxu0 0
        %939 = vmatpush1.bf16.xpose.msra.mxu0 0
        %940 = vmatprep.subr.bf16.mxu0 0
        %941 = vmatpush1.bf16.xpose.msra.mxu0 0
        %942 = vmatprep.subr.bf16.mxu0 0
        %943 = vmatpush1.bf16.xpose.msra.mxu0 0
        %944 = vmatprep.subr.bf16.mxu0 0
        %945 = vmatpush1.bf16.xpose.msra.mxu0 0
        %946 = vmatprep.subr.bf16.mxu0 0
        %947 = vmatpush1.bf16.xpose.msra.mxu0 0
        %948 = vmatprep.subr.bf16.mxu0 0
        %949 = vmatpush1.bf16.xpose.msra.mxu0 0
        %950 = vmatprep.subr.bf16.mxu0 0
        %951 = vmatpush1.bf16.xpose.msra.mxu0 0
        %952 = vmatprep.subr.bf16.mxu0 0
        %953 = vmatpush1.bf16.xpose.msra.mxu0 0
        %954 = vmatprep.subr.bf16.mxu0 0
        %955 = vmatpush1.bf16.xpose.msra.mxu0 0
        %956 = vmatprep.subr.bf16.mxu0 0
        %957 = vmatpush1.bf16.xpose.msra.mxu0 0
        %958 = vmatprep.mubr.bf16.mxu0 0
        %959 = vmatmul.mubr.bf16.gmra.mrb[0].mxu0 %v921
        %v960 = vpop.f32.mrb[0].mxu0
        %v961 = vadd.f32 %v917, %v960
        %v962 = vpop.f32.mrb[0].mxu0
        %v963 = vpop.f32.mrb[0].mxu0
        %v964 = vpop.f32.mrb[0].mxu0
        %965 = vdwg.mxu0
        %v966 = vsel %vm919, %v961, -inf
        %967 = vmax.xlane.f32.xlu0 %v966
        %v968 = vpop.xlane.xlu0 %967
        %v969 = vsub.f32 %v961, %v968
        %v970 = vmul.f32 %v969, 1.442695
        %v971 = vpow.pop %v970
        %v972 = vsel %vm919, %v971, 0.0
        %973 = vadd.xlane.f32.xlu0 %v972
        %v974 = vpop.xlane.xlu0 %973
        %v975 = vrcp.pop %v974
        %v976 = vmul.f32 %v971, %v975
        %v977 = vpack.c.bf16 %v976, %v976
        %v978 = vld [vmem:[#allocation3] sm:$0xf]
        %v980 = vsel %vm919, %v977, 0
        %vm982 = vcmask 1043456
        %v984 = vsel %vm982, %v978, 0
        %986 = vmatprep.subr.bf16.mxu0 0
        %987 = vmatpush1.bf16.msra.mxu0 %v984
        %988 = vmatprep.subr.bf16.mxu0 0
        %989 = vmatpush1.bf16.msra.mxu0 0
        %990 = vmatprep.subr.bf16.mxu0 0
        %991 = vmatpush1.bf16.msra.mxu0 0
        %992 = vmatprep.subr.bf16.mxu0 0
        %993 = vmatpush1.bf16.msra.mxu0 0
        %994 = vmatprep.subr.bf16.mxu0 0
        %995 = vmatpush1.bf16.msra.mxu0 0
        %996 = vmatprep.subr.bf16.mxu0 0
        %997 = vmatpush1.bf16.msra.mxu0 0
        %998 = vmatprep.subr.bf16.mxu0 0
        %999 = vmatpush1.bf16.msra.mxu0 0
        %1000 = vmatprep.subr.bf16.mxu0 0
        %1001 = vmatpush1.bf16.msra.mxu0 0
        %1002 = vmatprep.subr.bf16.mxu0 0
        %1003 = vmatpush1.bf16.msra.mxu0 0
        %1004 = vmatprep.subr.bf16.mxu0 0
        %1005 = vmatpush1.bf16.msra.mxu0 0
        %1006 = vmatprep.subr.bf16.mxu0 0
        %1007 = vmatpush1.bf16.msra.mxu0 0
        %1008 = vmatprep.subr.bf16.mxu0 0
        %1009 = vmatpush1.bf16.msra.mxu0 0
        %1010 = vmatprep.subr.bf16.mxu0 0
        %1011 = vmatpush1.bf16.msra.mxu0 0
        %1012 = vmatprep.subr.bf16.mxu0 0
        %1013 = vmatpush1.bf16.msra.mxu0 0
        %1014 = vmatprep.subr.bf16.mxu0 0
        %1015 = vmatpush1.bf16.msra.mxu0 0
        %1016 = vmatprep.subr.bf16.mxu0 0
        %1017 = vmatpush1.bf16.msra.mxu0 0
        %1018 = vmatprep.mubr.bf16.mxu0 0
        %1019 = vmatmul.mubr.bf16.gmra.mrb[0].mxu0 %v980
        %v1020 = vpop.f32.mrb[0].mxu0
        %v1021 = vadd.f32 0.0, %v1020
        %v1022 = vpop.f32.mrb[0].mxu0
        %v1023 = vpop.f32.mrb[0].mxu0
        %v1024 = vpop.f32.mrb[0].mxu0
        %1025 = vdwg.mxu0
        %v1026 = vpack.c.bf16 %v1021, %v1021
        %v1027 = vld [vmem:[%s7] sm:$0xf]
        %s1028 = scalar_lea.vmem [#allocation2], 4
        %v1029 = vld [vmem:[%s1028] sm:$0xf]
        %1031 = vrot.lane.b32.xlu0 %v910, 120
        %v1032 = vpop.permute.xlu0 %1031
        %v1034 = vsel %vm919, %v1032, 0
        %v1037 = vsel %vm919, %v1029, 0
        %1039 = vmatprep.subr.bf16.mxu0 0
        %1040 = vmatpush1.bf16.xpose.msra.mxu0 %v1037
        %1041 = vmatprep.subr.bf16.mxu0 0
        %1042 = vmatpush1.bf16.xpose.msra.mxu0 0
        %1043 = vmatprep.subr.bf16.mxu0 0
        %1044 = vmatpush1.bf16.xpose.msra.mxu0 0
        %1045 = vmatprep.subr.bf16.mxu0 0
        %1046 = vmatpush1.bf16.xpose.msra.mxu0 0
        %1047 = vmatprep.subr.bf16.mxu0 0
        %1048 = vmatpush1.bf16.xpose.msra.mxu0 0
        %1049 = vmatprep.subr.bf16.mxu0 0
        %1050 = vmatpush1.bf16.xpose.msra.mxu0 0
        %1051 = vmatprep.subr.bf16.mxu0 0
        %1052 = vmatpush1.bf16.xpose.msra.mxu0 0
        %1053 = vmatprep.subr.bf16.mxu0 0
        %1054 = vmatpush1.bf16.xpose.msra.mxu0 0
        %1055 = vmatprep.subr.bf16.mxu0 0
        %1056 = vmatpush1.bf16.xpose.msra.mxu0 0
        %1057 = vmatprep.subr.bf16.mxu0 0
        %1058 = vmatpush1.bf16.xpose.msra.mxu0 0
        %1059 = vmatprep.subr.bf16.mxu0 0
        %1060 = vmatpush1.bf16.xpose.msra.mxu0 0
        %1061 = vmatprep.subr.bf16.mxu0 0
        %1062 = vmatpush1.bf16.xpose.msra.mxu0 0
        %1063 = vmatprep.subr.bf16.mxu0 0
        %1064 = vmatpush1.bf16.xpose.msra.mxu0 0
        %1065 = vmatprep.subr.bf16.mxu0 0
        %1066 = vmatpush1.bf16.xpose.msra.mxu0 0
        %1067 = vmatprep.subr.bf16.mxu0 0
        %1068 = vmatpush1.bf16.xpose.msra.mxu0 0
        %1069 = vmatprep.subr.bf16.mxu0 0
        %1070 = vmatpush1.bf16.xpose.msra.mxu0 0
        %1071 = vmatprep.mubr.bf16.mxu0 0
        %1072 = vmatmul.mubr.bf16.gmra.mrb[0].mxu0 %v1034
        %v1073 = vpop.f32.mrb[0].mxu0
        %v1074 = vadd.f32 %v917, %v1073
        %v1075 = vpop.f32.mrb[0].mxu0
        %v1076 = vpop.f32.mrb[0].mxu0
        %v1077 = vpop.f32.mrb[0].mxu0
        %1078 = vdwg.mxu0
        %v1079 = vsel %vm919, %v1074, -inf
        %1080 = vmax.xlane.f32.xlu0 %v1079
        %v1081 = vpop.xlane.xlu0 %1080
        %v1082 = vsub.f32 %v1074, %v1081
        %v1083 = vmul.f32 %v1082, 1.442695
        %v1084 = vpow.pop %v1083
        %v1085 = vsel %vm919, %v1084, 0.0
        %1086 = vadd.xlane.f32.xlu0 %v1085
        %v1087 = vpop.xlane.xlu0 %1086
        %v1088 = vrcp.pop %v1087
        %v1089 = vmul.f32 %v1084, %v1088
        %v1090 = vpack.c.bf16 %v1089, %v1089
        %s1091 = scalar_lea.vmem [#allocation3], 4
        %v1092 = vld [vmem:[%s1091] sm:$0xf]
        %v1094 = vsel %vm919, %v1090, 0
        %v1097 = vsel %vm982, %v1092, 0
        %1099 = vmatprep.subr.bf16.mxu0 0
        %1100 = vmatpush1.bf16.msra.mxu0 %v1097
        %1101 = vmatprep.subr.bf16.mxu0 0
        %1102 = vmatpush1.bf16.msra.mxu0 0
        %1103 = vmatprep.subr.bf16.mxu0 0
        %1104 = vmatpush1.bf16.msra.mxu0 0
        %1105 = vmatprep.subr.bf16.mxu0 0
        %1106 = vmatpush1.bf16.msra.mxu0 0
        %1107 = vmatprep.subr.bf16.mxu0 0
        %1108 = vmatpush1.bf16.msra.mxu0 0
        %1109 = vmatprep.subr.bf16.mxu0 0
        %1110 = vmatpush1.bf16.msra.mxu0 0
        %1111 = vmatprep.subr.bf16.mxu0 0
        %1112 = vmatpush1.bf16.msra.mxu0 0
        %1113 = vmatprep.subr.bf16.mxu0 0
        %1114 = vmatpush1.bf16.msra.mxu0 0
        %1115 = vmatprep.subr.bf16.mxu0 0
        %1116 = vmatpush1.bf16.msra.mxu0 0
        %1117 = vmatprep.subr.bf16.mxu0 0
        %1118 = vmatpush1.bf16.msra.mxu0 0
        %1119 = vmatprep.subr.bf16.mxu0 0
        %1120 = vmatpush1.bf16.msra.mxu0 0
        %1121 = vmatprep.subr.bf16.mxu0 0
        %1122 = vmatpush1.bf16.msra.mxu0 0
        %1123 = vmatprep.subr.bf16.mxu0 0
        %1124 = vmatpush1.bf16.msra.mxu0 0
        %1125 = vmatprep.subr.bf16.mxu0 0
        %1126 = vmatpush1.bf16.msra.mxu0 0
        %1127 = vmatprep.subr.bf16.mxu0 0
        %1128 = vmatpush1.bf16.msra.mxu0 0
        %1129 = vmatprep.subr.bf16.mxu0 0
        %1130 = vmatpush1.bf16.msra.mxu0 0
        %1131 = vmatprep.mubr.bf16.mxu0 0
        %1132 = vmatmul.mubr.bf16.gmra.mrb[0].mxu0 %v1094
        %v1133 = vpop.f32.mrb[0].mxu0
        %v1134 = vadd.f32 0.0, %v1133
        %v1135 = vpop.f32.mrb[0].mxu0
        %v1136 = vpop.f32.mrb[0].mxu0
        %v1137 = vpop.f32.mrb[0].mxu0
        %1138 = vdwg.mxu0
        %v1139 = vpack.c.bf16 %v1134, %v1134
        %s1140 = scalar_lea.vmem %s7, 4
        %v1141 = vld [vmem:[%s1140] sm:$0xf]
        %v1143 = vsel %vm919, %v1139, 0
        %v1146 = vsel %vm982, %v1141, 0
        %1148 = vmatprep.subr.bf16.mxu0 0
        %1149 = vmatpush1.bf16.msra.mxu0 %v1146
        %1150 = vmatprep.subr.bf16.mxu0 0
        %1151 = vmatpush1.bf16.msra.mxu0 0
        %1152 = vmatprep.subr.bf16.mxu0 0
        %1153 = vmatpush1.bf16.msra.mxu0 0
        %1154 = vmatprep.subr.bf16.mxu0 0
        %1155 = vmatpush1.bf16.msra.mxu0 0
        %1156 = vmatprep.subr.bf16.mxu0 0
        %1157 = vmatpush1.bf16.msra.mxu0 0
        %1158 = vmatprep.subr.bf16.mxu0 0
        %1159 = vmatpush1.bf16.msra.mxu0 0
        %1160 = vmatprep.subr.bf16.mxu0 0
        %1161 = vmatpush1.bf16.msra.mxu0 0
        %1162 = vmatprep.subr.bf16.mxu0 0
        %1163 = vmatpush1.bf16.msra.mxu0 0
        %1164 = vmatprep.subr.bf16.mxu0 0
        %1165 = vmatpush1.bf16.msra.mxu0 0
        %1166 = vmatprep.subr.bf16.mxu0 0
        %1167 = vmatpush1.bf16.msra.mxu0 0
        %1168 = vmatprep.subr.bf16.mxu0 0
        %1169 = vmatpush1.bf16.msra.mxu0 0
        %1170 = vmatprep.subr.bf16.mxu0 0
        %1171 = vmatpush1.bf16.msra.mxu0 0
        %1172 = vmatprep.subr.bf16.mxu0 0
        %1173 = vmatpush1.bf16.msra.mxu0 0
        %1174 = vmatprep.subr.bf16.mxu0 0
        %1175 = vmatpush1.bf16.msra.mxu0 0
        %1176 = vmatprep.subr.bf16.mxu0 0
        %1177 = vmatpush1.bf16.msra.mxu0 0
        %1178 = vmatprep.subr.bf16.mxu0 0
        %1179 = vmatpush1.bf16.msra.mxu0 0
        %1180 = vmatprep.mubr.bf16.mxu0 0
        %1181 = vmatmul.mubr.bf16.gmra.mrb[0].mxu0 %v1143
        %v1182 = vpop.f32.mrb[0].mxu0
        %v1183 = vadd.f32 0.0, %v1182
        %v1184 = vpop.f32.mrb[0].mxu0
        %v1185 = vpop.f32.mrb[0].mxu0
        %v1186 = vpop.f32.mrb[0].mxu0
        %1187 = vdwg.mxu0
        %v1189 = vsel %vm919, %v1026, 0
        %v1192 = vsel %vm982, %v1027, 0
        %1194 = vmatprep.subr.bf16.mxu0 0
        %1195 = vmatpush1.bf16.msra.mxu0 %v1192
        %1196 = vmatprep.subr.bf16.mxu0 0
        %1197 = vmatpush1.bf16.msra.mxu0 0
        %1198 = vmatprep.subr.bf16.mxu0 0
        %1199 = vmatpush1.bf16.msra.mxu0 0
        %1200 = vmatprep.subr.bf16.mxu0 0
        %1201 = vmatpush1.bf16.msra.mxu0 0
        %1202 = vmatprep.subr.bf16.mxu0 0
        %1203 = vmatpush1.bf16.msra.mxu0 0
        %1204 = vmatprep.subr.bf16.mxu0 0
        %1205 = vmatpush1.bf16.msra.mxu0 0
        %1206 = vmatprep.subr.bf16.mxu0 0
        %1207 = vmatpush1.bf16.msra.mxu0 0
        %1208 = vmatprep.subr.bf16.mxu0 0
        %1209 = vmatpush1.bf16.msra.mxu0 0
        %1210 = vmatprep.subr.bf16.mxu0 0
        %1211 = vmatpush1.bf16.msra.mxu0 0
        %1212 = vmatprep.subr.bf16.mxu0 0
        %1213 = vmatpush1.bf16.msra.mxu0 0
        %1214 = vmatprep.subr.bf16.mxu0 0
        %1215 = vmatpush1.bf16.msra.mxu0 0
        %1216 = vmatprep.subr.bf16.mxu0 0
        %1217 = vmatpush1.bf16.msra.mxu0 0
        %1218 = vmatprep.subr.bf16.mxu0 0
        %1219 = vmatpush1.bf16.msra.mxu0 0
        %1220 = vmatprep.subr.bf16.mxu0 0
        %1221 = vmatpush1.bf16.msra.mxu0 0
        %1222 = vmatprep.subr.bf16.mxu0 0
        %1223 = vmatpush1.bf16.msra.mxu0 0
        %1224 = vmatprep.subr.bf16.mxu0 0
        %1225 = vmatpush1.bf16.msra.mxu0 0
        %1226 = vmatprep.mubr.bf16.mxu0 0
        %1227 = vmatmul.mubr.bf16.gmra.mrb[0].mxu0 %v1189
        %v1228 = vpop.f32.mrb[0].mxu0
        %v1229 = vadd.f32 %v1183, %v1228
        %v1230 = vpop.f32.mrb[0].mxu0
        %v1231 = vpop.f32.mrb[0].mxu0
        %v1232 = vpop.f32.mrb[0].mxu0
        %1233 = vdwg.mxu0
        %s1234 = scalar_lea.vmem [#allocation2], 8
        %v1235 = vld [vmem:[%s1234] sm:$0xf]
        %1236 = vrot.lane.b32.xlu0 %v910, 112
        %v1237 = vpop.permute.xlu0 %1236
        %v1239 = vsel %vm919, %v1237, 0
        %v1242 = vsel %vm919, %v1235, 0
        %1244 = vmatprep.subr.bf16.mxu0 0
        %1245 = vmatpush1.bf16.xpose.msra.mxu0 %v1242
        %1246 = vmatprep.subr.bf16.mxu0 0
        %1247 = vmatpush1.bf16.xpose.msra.mxu0 0
        %1248 = vmatprep.subr.bf16.mxu0 0
        %1249 = vmatpush1.bf16.xpose.msra.mxu0 0
        %1250 = vmatprep.subr.bf16.mxu0 0
        %1251 = vmatpush1.bf16.xpose.msra.mxu0 0
        %1252 = vmatprep.subr.bf16.mxu0 0
        %1253 = vmatpush1.bf16.xpose.msra.mxu0 0
        %1254 = vmatprep.subr.bf16.mxu0 0
        %1255 = vmatpush1.bf16.xpose.msra.mxu0 0
        %1256 = vmatprep.subr.bf16.mxu0 0
        %1257 = vmatpush1.bf16.xpose.msra.mxu0 0
        %1258 = vmatprep.subr.bf16.mxu0 0
        %1259 = vmatpush1.bf16.xpose.msra.mxu0 0
        %1260 = vmatprep.subr.bf16.mxu0 0
        %1261 = vmatpush1.bf16.xpose.msra.mxu0 0
        %1262 = vmatprep.subr.bf16.mxu0 0
        %1263 = vmatpush1.bf16.xpose.msra.mxu0 0
        %1264 = vmatprep.subr.bf16.mxu0 0
        %1265 = vmatpush1.bf16.xpose.msra.mxu0 0
        %1266 = vmatprep.subr.bf16.mxu0 0
        %1267 = vmatpush1.bf16.xpose.msra.mxu0 0
        %1268 = vmatprep.subr.bf16.mxu0 0
        %1269 = vmatpush1.bf16.xpose.msra.mxu0 0
        %1270 = vmatprep.subr.bf16.mxu0 0
        %1271 = vmatpush1.bf16.xpose.msra.mxu0 0
        %1272 = vmatprep.subr.bf16.mxu0 0
        %1273 = vmatpush1.bf16.xpose.msra.mxu0 0
        %1274 = vmatprep.subr.bf16.mxu0 0
        %1275 = vmatpush1.bf16.xpose.msra.mxu0 0
        %1276 = vmatprep.mubr.bf16.mxu0 0
        %1277 = vmatmul.mubr.bf16.gmra.mrb[0].mxu0 %v1239
        %v1278 = vpop.f32.mrb[0].mxu0
        %v1279 = vadd.f32 %v917, %v1278
        %v1280 = vpop.f32.mrb[0].mxu0
        %v1281 = vpop.f32.mrb[0].mxu0
        %v1282 = vpop.f32.mrb[0].mxu0
        %1283 = vdwg.mxu0
        %v1284 = vsel %vm919, %v1279, -inf
        %1285 = vmax.xlane.f32.xlu0 %v1284
        %v1286 = vpop.xlane.xlu0 %1285
        %v1287 = vsub.f32 %v1279, %v1286
        %v1288 = vmul.f32 %v1287, 1.442695
        %v1289 = vpow.pop %v1288
        %v1290 = vsel %vm919, %v1289, 0.0
        %1291 = vadd.xlane.f32.xlu0 %v1290
        %v1292 = vpop.xlane.xlu0 %1291
        %v1293 = vrcp.pop %v1292
        %v1294 = vmul.f32 %v1289, %v1293
        %v1295 = vpack.c.bf16 %v1294, %v1294
        %s1296 = scalar_lea.vmem [#allocation3], 8
        %v1297 = vld [vmem:[%s1296] sm:$0xf]
        %v1299 = vsel %vm919, %v1295, 0
        %v1302 = vsel %vm982, %v1297, 0
        %1304 = vmatprep.subr.bf16.mxu0 0
        %1305 = vmatpush1.bf16.msra.mxu0 %v1302
        %1306 = vmatprep.subr.bf16.mxu0 0
        %1307 = vmatpush1.bf16.msra.mxu0 0
        %1308 = vmatprep.subr.bf16.mxu0 0
        %1309 = vmatpush1.bf16.msra.mxu0 0
        %1310 = vmatprep.subr.bf16.mxu0 0
        %1311 = vmatpush1.bf16.msra.mxu0 0
        %1312 = vmatprep.subr.bf16.mxu0 0
        %1313 = vmatpush1.bf16.msra.mxu0 0
        %1314 = vmatprep.subr.bf16.mxu0 0
        %1315 = vmatpush1.bf16.msra.mxu0 0
        %1316 = vmatprep.subr.bf16.mxu0 0
        %1317 = vmatpush1.bf16.msra.mxu0 0
        %1318 = vmatprep.subr.bf16.mxu0 0
        %1319 = vmatpush1.bf16.msra.mxu0 0
        %1320 = vmatprep.subr.bf16.mxu0 0
        %1321 = vmatpush1.bf16.msra.mxu0 0
        %1322 = vmatprep.subr.bf16.mxu0 0
        %1323 = vmatpush1.bf16.msra.mxu0 0
        %1324 = vmatprep.subr.bf16.mxu0 0
        %1325 = vmatpush1.bf16.msra.mxu0 0
        %1326 = vmatprep.subr.bf16.mxu0 0
        %1327 = vmatpush1.bf16.msra.mxu0 0
        %1328 = vmatprep.subr.bf16.mxu0 0
        %1329 = vmatpush1.bf16.msra.mxu0 0
        %1330 = vmatprep.subr.bf16.mxu0 0
        %1331 = vmatpush1.bf16.msra.mxu0 0
        %1332 = vmatprep.subr.bf16.mxu0 0
        %1333 = vmatpush1.bf16.msra.mxu0 0
        %1334 = vmatprep.subr.bf16.mxu0 0
        %1335 = vmatpush1.bf16.msra.mxu0 0
        %1336 = vmatprep.mubr.bf16.mxu0 0
        %1337 = vmatmul.mubr.bf16.gmra.mrb[0].mxu0 %v1299
        %v1338 = vpop.f32.mrb[0].mxu0
        %v1339 = vadd.f32 0.0, %v1338
        %v1340 = vpop.f32.mrb[0].mxu0
        %v1341 = vpop.f32.mrb[0].mxu0
        %v1342 = vpop.f32.mrb[0].mxu0
        %1343 = vdwg.mxu0
        %v1344 = vpack.c.bf16 %v1339, %v1339
        %s1345 = scalar_lea.vmem %s7, 8
        %v1346 = vld [vmem:[%s1345] sm:$0xf]
        %v1348 = vsel %vm919, %v1344, 0
        %v1351 = vsel %vm982, %v1346, 0
        %1353 = vmatprep.subr.bf16.mxu0 0
        %1354 = vmatpush1.bf16.msra.mxu0 %v1351
        %1355 = vmatprep.subr.bf16.mxu0 0
        %1356 = vmatpush1.bf16.msra.mxu0 0
        %1357 = vmatprep.subr.bf16.mxu0 0
        %1358 = vmatpush1.bf16.msra.mxu0 0
        %1359 = vmatprep.subr.bf16.mxu0 0
        %1360 = vmatpush1.bf16.msra.mxu0 0
        %1361 = vmatprep.subr.bf16.mxu0 0
        %1362 = vmatpush1.bf16.msra.mxu0 0
        %1363 = vmatprep.subr.bf16.mxu0 0
        %1364 = vmatpush1.bf16.msra.mxu0 0
        %1365 = vmatprep.subr.bf16.mxu0 0
        %1366 = vmatpush1.bf16.msra.mxu0 0
        %1367 = vmatprep.subr.bf16.mxu0 0
        %1368 = vmatpush1.bf16.msra.mxu0 0
        %1369 = vmatprep.subr.bf16.mxu0 0
        %1370 = vmatpush1.bf16.msra.mxu0 0
        %1371 = vmatprep.subr.bf16.mxu0 0
        %1372 = vmatpush1.bf16.msra.mxu0 0
        %1373 = vmatprep.subr.bf16.mxu0 0
        %1374 = vmatpush1.bf16.msra.mxu0 0
        %1375 = vmatprep.subr.bf16.mxu0 0
        %1376 = vmatpush1.bf16.msra.mxu0 0
        %1377 = vmatprep.subr.bf16.mxu0 0
        %1378 = vmatpush1.bf16.msra.mxu0 0
        %1379 = vmatprep.subr.bf16.mxu0 0
        %1380 = vmatpush1.bf16.msra.mxu0 0
        %1381 = vmatprep.subr.bf16.mxu0 0
        %1382 = vmatpush1.bf16.msra.mxu0 0
        %1383 = vmatprep.subr.bf16.mxu0 0
        %1384 = vmatpush1.bf16.msra.mxu0 0
        %1385 = vmatprep.mubr.bf16.mxu0 0
        %1386 = vmatmul.mubr.bf16.gmra.mrb[0].mxu0 %v1348
        %v1387 = vpop.f32.mrb[0].mxu0
        %v1388 = vadd.f32 0.0, %v1387
        %v1389 = vpop.f32.mrb[0].mxu0
        %v1390 = vpop.f32.mrb[0].mxu0
        %v1391 = vpop.f32.mrb[0].mxu0
        %1392 = vdwg.mxu0
        %v1393 = vadd.f32 %v1229, %v1388
        %s1394 = scalar_lea.vmem [#allocation2], 12
        %v1395 = vld [vmem:[%s1394] sm:$0xf]
        %1396 = vrot.lane.b32.xlu0 %v910, 104
        %v1397 = vpop.permute.xlu0 %1396
        %v1399 = vsel %vm919, %v1397, 0
        %v1402 = vsel %vm919, %v1395, 0
        %1404 = vmatprep.subr.bf16.mxu0 0
        %1405 = vmatpush1.bf16.xpose.msra.mxu0 %v1402
        %1406 = vmatprep.subr.bf16.mxu0 0
        %1407 = vmatpush1.bf16.xpose.msra.mxu0 0
        %1408 = vmatprep.subr.bf16.mxu0 0
        %1409 = vmatpush1.bf16.xpose.msra.mxu0 0
        %1410 = vmatprep.subr.bf16.mxu0 0
        %1411 = vmatpush1.bf16.xpose.msra.mxu0 0
        %1412 = vmatprep.subr.bf16.mxu0 0
        %1413 = vmatpush1.bf16.xpose.msra.mxu0 0
        %1414 = vmatprep.subr.bf16.mxu0 0
        %1415 = vmatpush1.bf16.xpose.msra.mxu0 0
        %1416 = vmatprep.subr.bf16.mxu0 0
        %1417 = vmatpush1.bf16.xpose.msra.mxu0 0
        %1418 = vmatprep.subr.bf16.mxu0 0
        %1419 = vmatpush1.bf16.xpose.msra.mxu0 0
        %1420 = vmatprep.subr.bf16.mxu0 0
        %1421 = vmatpush1.bf16.xpose.msra.mxu0 0
        %1422 = vmatprep.subr.bf16.mxu0 0
        %1423 = vmatpush1.bf16.xpose.msra.mxu0 0
        %1424 = vmatprep.subr.bf16.mxu0 0
        %1425 = vmatpush1.bf16.xpose.msra.mxu0 0
        %1426 = vmatprep.subr.bf16.mxu0 0
        %1427 = vmatpush1.bf16.xpose.msra.mxu0 0
        %1428 = vmatprep.subr.bf16.mxu0 0
        %1429 = vmatpush1.bf16.xpose.msra.mxu0 0
        %1430 = vmatprep.subr.bf16.mxu0 0
        %1431 = vmatpush1.bf16.xpose.msra.mxu0 0
        %1432 = vmatprep.subr.bf16.mxu0 0
        %1433 = vmatpush1.bf16.xpose.msra.mxu0 0
        %1434 = vmatprep.subr.bf16.mxu0 0
        %1435 = vmatpush1.bf16.xpose.msra.mxu0 0
        %1436 = vmatprep.mubr.bf16.mxu0 0
        %1437 = vmatmul.mubr.bf16.gmra.mrb[0].mxu0 %v1399
        %v1438 = vpop.f32.mrb[0].mxu0
        %v1439 = vadd.f32 %v917, %v1438
        %v1440 = vpop.f32.mrb[0].mxu0
        %v1441 = vpop.f32.mrb[0].mxu0
        %v1442 = vpop.f32.mrb[0].mxu0
        %1443 = vdwg.mxu0
        %v1444 = vsel %vm919, %v1439, -inf
        %1445 = vmax.xlane.f32.xlu0 %v1444
        %v1446 = vpop.xlane.xlu0 %1445
        %v1447 = vsub.f32 %v1439, %v1446
        %v1448 = vmul.f32 %v1447, 1.442695
        %v1449 = vpow.pop %v1448
        %v1450 = vsel %vm919, %v1449, 0.0
        %1451 = vadd.xlane.f32.xlu0 %v1450
        %v1452 = vpop.xlane.xlu0 %1451
        %v1453 = vrcp.pop %v1452
        %v1454 = vmul.f32 %v1449, %v1453
        %v1455 = vpack.c.bf16 %v1454, %v1454
        %s1456 = scalar_lea.vmem [#allocation3], 12
        %v1457 = vld [vmem:[%s1456] sm:$0xf]
        %v1459 = vsel %vm919, %v1455, 0
        %v1462 = vsel %vm982, %v1457, 0
        %1464 = vmatprep.subr.bf16.mxu0 0
        %1465 = vmatpush1.bf16.msra.mxu0 %v1462
        %1466 = vmatprep.subr.bf16.mxu0 0
        %1467 = vmatpush1.bf16.msra.mxu0 0
        %1468 = vmatprep.subr.bf16.mxu0 0
        %1469 = vmatpush1.bf16.msra.mxu0 0
        %1470 = vmatprep.subr.bf16.mxu0 0
        %1471 = vmatpush1.bf16.msra.mxu0 0
        %1472 = vmatprep.subr.bf16.mxu0 0
        %1473 = vmatpush1.bf16.msra.mxu0 0
        %1474 = vmatprep.subr.bf16.mxu0 0
        %1475 = vmatpush1.bf16.msra.mxu0 0
        %1476 = vmatprep.subr.bf16.mxu0 0
        %1477 = vmatpush1.bf16.msra.mxu0 0
        %1478 = vmatprep.subr.bf16.mxu0 0
        %1479 = vmatpush1.bf16.msra.mxu0 0
        %1480 = vmatprep.subr.bf16.mxu0 0
        %1481 = vmatpush1.bf16.msra.mxu0 0
        %1482 = vmatprep.subr.bf16.mxu0 0
        %1483 = vmatpush1.bf16.msra.mxu0 0
        %1484 = vmatprep.subr.bf16.mxu0 0
        %1485 = vmatpush1.bf16.msra.mxu0 0
        %1486 = vmatprep.subr.bf16.mxu0 0
        %1487 = vmatpush1.bf16.msra.mxu0 0
        %1488 = vmatprep.subr.bf16.mxu0 0
        %1489 = vmatpush1.bf16.msra.mxu0 0
        %1490 = vmatprep.subr.bf16.mxu0 0
        %1491 = vmatpush1.bf16.msra.mxu0 0
        %1492 = vmatprep.subr.bf16.mxu0 0
        %1493 = vmatpush1.bf16.msra.mxu0 0
        %1494 = vmatprep.subr.bf16.mxu0 0
        %1495 = vmatpush1.bf16.msra.mxu0 0
        %1496 = vmatprep.mubr.bf16.mxu0 0
        %1497 = vmatmul.mubr.bf16.gmra.mrb[0].mxu0 %v1459
        %v1498 = vpop.f32.mrb[0].mxu0
        %v1499 = vadd.f32 0.0, %v1498
        %v1500 = vpop.f32.mrb[0].mxu0
        %v1501 = vpop.f32.mrb[0].mxu0
        %v1502 = vpop.f32.mrb[0].mxu0
        %1503 = vdwg.mxu0
        %v1504 = vpack.c.bf16 %v1499, %v1499
        %s1505 = scalar_lea.vmem %s7, 12
        %v1506 = vld [vmem:[%s1505] sm:$0xf]
        %v1508 = vsel %vm919, %v1504, 0
        %v1511 = vsel %vm982, %v1506, 0
        %1513 = vmatprep.subr.bf16.mxu0 0
        %1514 = vmatpush1.bf16.msra.mxu0 %v1511
        %1515 = vmatprep.subr.bf16.mxu0 0
        %1516 = vmatpush1.bf16.msra.mxu0 0
        %1517 = vmatprep.subr.bf16.mxu0 0
        %1518 = vmatpush1.bf16.msra.mxu0 0
        %1519 = vmatprep.subr.bf16.mxu0 0
        %1520 = vmatpush1.bf16.msra.mxu0 0
        %1521 = vmatprep.subr.bf16.mxu0 0
        %1522 = vmatpush1.bf16.msra.mxu0 0
        %1523 = vmatprep.subr.bf16.mxu0 0
        %1524 = vmatpush1.bf16.msra.mxu0 0
        %1525 = vmatprep.subr.bf16.mxu0 0
        %1526 = vmatpush1.bf16.msra.mxu0 0
        %1527 = vmatprep.subr.bf16.mxu0 0
        %1528 = vmatpush1.bf16.msra.mxu0 0
        %1529 = vmatprep.subr.bf16.mxu0 0
        %1530 = vmatpush1.bf16.msra.mxu0 0
        %1531 = vmatprep.subr.bf16.mxu0 0
        %1532 = vmatpush1.bf16.msra.mxu0 0
        %1533 = vmatprep.subr.bf16.mxu0 0
        %1534 = vmatpush1.bf16.msra.mxu0 0
        %1535 = vmatprep.subr.bf16.mxu0 0
        %1536 = vmatpush1.bf16.msra.mxu0 0
        %1537 = vmatprep.subr.bf16.mxu0 0
        %1538 = vmatpush1.bf16.msra.mxu0 0
        %1539 = vmatprep.subr.bf16.mxu0 0
        %1540 = vmatpush1.bf16.msra.mxu0 0
        %1541 = vmatprep.subr.bf16.mxu0 0
        %1542 = vmatpush1.bf16.msra.mxu0 0
        %1543 = vmatprep.subr.bf16.mxu0 0
        %1544 = vmatpush1.bf16.msra.mxu0 0
        %1545 = vmatprep.mubr.bf16.mxu0 0
        %1546 = vmatmul.mubr.bf16.gmra.mrb[0].mxu0 %v1508
        %v1547 = vpop.f32.mrb[0].mxu0
        %v1548 = vadd.f32 0.0, %v1547
        %v1549 = vpop.f32.mrb[0].mxu0
        %v1550 = vpop.f32.mrb[0].mxu0
        %v1551 = vpop.f32.mrb[0].mxu0
        %1552 = vdwg.mxu0
        %v1553 = vadd.f32 %v1393, %v1548
        %v1554 = vld [vmem:[#allocation10] sm:$0x1]
        %v1556 = vlaneseq
        %v1557 = vshrl.u32 %v1556, 7
        %v1558 = vsub.s32 0, %v1557
        %v1559 = vrot.slane %v1554, %v1558
        %v1561 = vadd.f32 %v1553, %v1559
        %v1562 = vadd.f32 %v763, %v1561
        %v1563 = vld [vmem:[%s9] sm:$0x1]
        %v1564 = vld [vmem:[%s10] sm:$0x1]
        %v1565 = vsel %vm787, %v1562, 0.0
        %1566 = vadd.xlane.f32.xlu0 %v1565
        %v1567 = vpop.xlane.xlu0 %1566
        %v1568 = vrcp.pop 32.0
        %v1569 = vmul.f32 %v1567, %v1568
        %v1570 = vsub.f32 %v1562, %v1569
        %v1571 = vmul.f32 %v1570, %v1570
        %v1572 = vsel %vm787, %v1571, 0.0
        %1573 = vadd.xlane.f32.xlu0 %v1572
        %v1574 = vpop.xlane.xlu0 %1573
        %v1575 = vmul.f32 %v1574, %v1568
        %v1576 = vadd.f32 %v1575, 1e-12
        %v1577 = vrsqrt.pop %v1576
        %v1578 = vmul.f32 %v1570, %v1577
        %v1580 = vlaneseq
        %v1581 = vshrl.u32 %v1580, 7
        %v1582 = vsub.s32 0, %v1581
        %v1583 = vrot.slane %v1563, %v1582
        %v1585 = vmul.f32 %v1578, %v1583
        %v1587 = vlaneseq
        %v1588 = vshrl.u32 %v1587, 7
        %v1589 = vsub.s32 0, %v1588
        %v1590 = vrot.slane %v1564, %v1589
        %v1592 = vadd.f32 %v1585, %v1590
        %v1593 = vpack.c.bf16 %v1592, %v1592
        %v1594 = vld [vmem:[%s11] sm:$0xf]
        %v1595 = vld [vmem:[%s11 + $0x4] sm:$0xf]
        %v1596 = vld [vmem:[%s11 + $0x8] sm:$0xf]
        %v1597 = vld [vmem:[%s11 + $0xc] sm:$0xf]
        %v1598 = vld [vmem:[%s12] sm:$0x1]
        %v1600 = vlaneseq
        %v1601 = vshrl.u32 %v1600, 7
        %v1602 = vsub.s32 0, %v1601
        %v1603 = vrot.slane %v1598, %v1602
        %v1609 = vunpack.c.l.b16 %v1594
        %v1610 = vunpack.c.l.b16 %v1595
        %v1611 = vunpack.c.l.b16 %v1596
        %v1612 = vunpack.c.l.b16 %v1597
        %v1613 = vpack.c.b16 %v1610, %v1609
        %v1614 = vpack.c.b16 %v1612, %v1611
        %v1618 = vsel %vm787, %v1593, 0
        %1620 = vmatprep.subr.bf16.mxu0 0
        %1621 = vmatpush1.bf16.msra.mxu0 %v1613
        %1622 = vmatprep.subr.bf16.mxu0 0
        %1623 = vmatpush1.bf16.msra.mxu0 %v1614
        %1624 = vmatprep.subr.bf16.mxu0 0
        %1625 = vmatpush1.bf16.msra.mxu0 0
        %1626 = vmatprep.subr.bf16.mxu0 0
        %1627 = vmatpush1.bf16.msra.mxu0 0
        %1628 = vmatprep.subr.bf16.mxu0 0
        %1629 = vmatpush1.bf16.msra.mxu0 0
        %1630 = vmatprep.subr.bf16.mxu0 0
        %1631 = vmatpush1.bf16.msra.mxu0 0
        %1632 = vmatprep.subr.bf16.mxu0 0
        %1633 = vmatpush1.bf16.msra.mxu0 0
        %1634 = vmatprep.subr.bf16.mxu0 0
        %1635 = vmatpush1.bf16.msra.mxu0 0
        %1636 = vmatprep.subr.bf16.mxu0 0
        %1637 = vmatpush1.bf16.msra.mxu0 0
        %1638 = vmatprep.subr.bf16.mxu0 0
        %1639 = vmatpush1.bf16.msra.mxu0 0
        %1640 = vmatprep.subr.bf16.mxu0 0
        %1641 = vmatpush1.bf16.msra.mxu0 0
        %1642 = vmatprep.subr.bf16.mxu0 0
        %1643 = vmatpush1.bf16.msra.mxu0 0
        %1644 = vmatprep.subr.bf16.mxu0 0
        %1645 = vmatpush1.bf16.msra.mxu0 0
        %1646 = vmatprep.subr.bf16.mxu0 0
        %1647 = vmatpush1.bf16.msra.mxu0 0
        %1648 = vmatprep.subr.bf16.mxu0 0
        %1649 = vmatpush1.bf16.msra.mxu0 0
        %1650 = vmatprep.subr.bf16.mxu0 0
        %1651 = vmatpush1.bf16.msra.mxu0 0
        %1652 = vmatprep.mubr.bf16.mxu0 0
        %1653 = vmatmul.mubr.bf16.gmra.mrb[0].mxu0 %v1618
        %v1654 = vpop.f32.mrb[0].mxu0
        %v1655 = vadd.f32 %v1603, %v1654
        %v1656 = vpop.f32.mrb[0].mxu0
        %v1657 = vpop.f32.mrb[0].mxu0
        %v1658 = vpop.f32.mrb[0].mxu0
        %1659 = vdwg.mxu0
        %v1660 = vmul.f32 %v1655, 0.5
        %v1661 = vmul.f32 %v1655, 0.044715
        %v1662 = vmul.f32 %v1661, %v1655
        %v1663 = vmul.f32 %v1662, %v1655
        %v1664 = vadd.f32 %v1655, %v1663
        %v1665 = vmul.f32 %v1664, 0.7978846
        %v1666 = vtanh.pop %v1665
        %v1667 = vadd.f32 %v1666, 1.0
        %v1668 = vmul.f32 %v1660, %v1667
        %v1669 = vmul.f32 %v1668, 0.5
        %v1670 = vmul.f32 %v1668, 0.044715
        %v1671 = vmul.f32 %v1670, %v1668
        %v1672 = vmul.f32 %v1671, %v1668
        %v1673 = vadd.f32 %v1668, %v1672
        %v1674 = vmul.f32 %v1673, 0.7978846
        %v1675 = vtanh.pop %v1674
        %v1676 = vadd.f32 %v1675, 1.0
        %v1677 = vmul.f32 %v1669, %v1676
        %v1678 = vpack.c.bf16 %v1677, %v1677
        %v1679 = vld [vmem:[%s13] sm:$0xf]
        %v1680 = vld [vmem:[%s13 + $0x4] sm:$0xf]
        %v1681 = vld [vmem:[%s13 + $0x8] sm:$0xf]
        %v1682 = vld [vmem:[%s13 + $0xc] sm:$0xf]
        %v1683 = vld [vmem:[%s13 + $0x10] sm:$0xf]
        %v1684 = vld [vmem:[%s13 + $0x14] sm:$0xf]
        %v1685 = vld [vmem:[%s13 + $0x18] sm:$0xf]
        %v1686 = vld [vmem:[%s13 + $0x1c] sm:$0xf]
        %v1687 = vld [vmem:[%s14] sm:$0x1]
        %v1689 = vlaneseq
        %v1690 = vshrl.u32 %v1689, 7
        %v1691 = vsub.s32 0, %v1690
        %v1692 = vrot.slane %v1687, %v1691
        %v1702 = vunpack.c.l.b16 %v1679
        %v1703 = vunpack.c.l.b16 %v1680
        %v1704 = vunpack.c.l.b16 %v1681
        %v1705 = vunpack.c.l.b16 %v1682
        %v1706 = vunpack.c.l.b16 %v1683
        %v1707 = vunpack.c.l.b16 %v1684
        %v1708 = vunpack.c.l.b16 %v1685
        %v1709 = vunpack.c.l.b16 %v1686
        %v1710 = vpack.c.b16 %v1703, %v1702
        %v1711 = vpack.c.b16 %v1705, %v1704
        %v1712 = vpack.c.b16 %v1707, %v1706
        %v1713 = vpack.c.b16 %v1709, %v1708
        %vm1718 = vcmask 523264
        %v1720 = vsel %vm1718, %v1678, 0
        %1722 = vmatprep.subr.bf16.mxu0 0
        %1723 = vmatpush1.bf16.msra.mxu0 %v1710
        %1724 = vmatprep.subr.bf16.mxu0 0
        %1725 = vmatpush1.bf16.msra.mxu0 %v1711
        %1726 = vmatprep.subr.bf16.mxu0 0
        %1727 = vmatpush1.bf16.msra.mxu0 %v1712
        %1728 = vmatprep.subr.bf16.mxu0 0
        %1729 = vmatpush1.bf16.msra.mxu0 %v1713
        %1730 = vmatprep.subr.bf16.mxu0 0
        %1731 = vmatpush1.bf16.msra.mxu0 0
        %1732 = vmatprep.subr.bf16.mxu0 0
        %1733 = vmatpush1.bf16.msra.mxu0 0
        %1734 = vmatprep.subr.bf16.mxu0 0
        %1735 = vmatpush1.bf16.msra.mxu0 0
        %1736 = vmatprep.subr.bf16.mxu0 0
        %1737 = vmatpush1.bf16.msra.mxu0 0
        %1738 = vmatprep.subr.bf16.mxu0 0
        %1739 = vmatpush1.bf16.msra.mxu0 0
        %1740 = vmatprep.subr.bf16.mxu0 0
        %1741 = vmatpush1.bf16.msra.mxu0 0
        %1742 = vmatprep.subr.bf16.mxu0 0
        %1743 = vmatpush1.bf16.msra.mxu0 0
        %1744 = vmatprep.subr.bf16.mxu0 0
        %1745 = vmatpush1.bf16.msra.mxu0 0
        %1746 = vmatprep.subr.bf16.mxu0 0
        %1747 = vmatpush1.bf16.msra.mxu0 0
        %1748 = vmatprep.subr.bf16.mxu0 0
        %1749 = vmatpush1.bf16.msra.mxu0 0
        %1750 = vmatprep.subr.bf16.mxu0 0
        %1751 = vmatpush1.bf16.msra.mxu0 0
        %1752 = vmatprep.subr.bf16.mxu0 0
        %1753 = vmatpush1.bf16.msra.mxu0 0
        %1754 = vmatprep.mubr.bf16.mxu0 0
        %1755 = vmatmul.mubr.bf16.gmra.mrb[0].mxu0 %v1720
        %v1756 = vpop.f32.mrb[0].mxu0
        %v1757 = vadd.f32 %v1692, %v1756
        %v1758 = vpop.f32.mrb[0].mxu0
        %v1759 = vpop.f32.mrb[0].mxu0
        %v1760 = vpop.f32.mrb[0].mxu0
        %1761 = vdwg.mxu0
        %v1762 = vadd.f32 %v1592, %v1757
        %v1763 = vld [vmem:[%s15] sm:$0x1]
        %v1764 = vld [vmem:[%s16] sm:$0x1]
        %v1765 = vsel %vm787, %v1762, 0.0
        %1766 = vadd.xlane.f32.xlu0 %v1765
        %v1767 = vpop.xlane.xlu0 %1766
        %v1768 = vmul.f32 %v1767, %v1568
        %v1769 = vsub.f32 %v1762, %v1768
        %v1770 = vmul.f32 %v1769, %v1769
        %v1771 = vsel %vm787, %v1770, 0.0
        %1772 = vadd.xlane.f32.xlu0 %v1771
        %v1773 = vpop.xlane.xlu0 %1772
        %v1774 = vmul.f32 %v1773, %v1568
        %v1775 = vadd.f32 %v1774, 1e-12
        %v1776 = vrsqrt.pop %v1775
        %v1777 = vmul.f32 %v1769, %v1776
        %v1779 = vlaneseq
        %v1780 = vshrl.u32 %v1779, 7
        %v1781 = vsub.s32 0, %v1780
        %v1782 = vrot.slane %v1763, %v1781
        %v1784 = vmul.f32 %v1777, %v1782
        %v1786 = vlaneseq
        %v1787 = vshrl.u32 %v1786, 7
        %v1788 = vsub.s32 0, %v1787
        %v1789 = vrot.slane %v1764, %v1788
        %v1791 = vadd.f32 %v1784, %v1789
        %v1792 = vpack.c.bf16 %v1791, %v1791
        %vm1793 = vcmask 257024
        %1794 = vst.msk [vmem:[%s637] sm:$0xf] %vm1793, %v1792
        %s1795 = sand.u32 %s430, 1
        %s1796 = scalar_lea.sflag [#allocation6], %s1795
        %s1797 = sand.u32 %s430, 1
        %s1798 = smul.addr %s1797, 4
        %s1799 = scalar_lea.vmem [#allocation12], %s1798
        // Predicated region
        $region117: #{tpu_custom_call.1} parent=87 // pred_check
          %p1800 = pneg %p440
        $region118: #{tpu_custom_call.1} parent=87 // pred_check_branch
          %1802 = sbr.rel (%p1800) target = $region120
        $region119: #{tpu_custom_call.1} parent=87 // pred_region
          %s1804 = ssub.s32 64, 64
          %1805 = vsyncadd %s1796, %s1804
          %s1806 = sadd.s32 %s41, %s40
          %s1807 = smul.addr %s1806, 64
          %s1808 = scalar_lea.hbm %s17, %s1807
          %s1810 = sshll.u32 %s1799, 4
          %s1811 = int_to_ptr.vmem [resolvable:$true] %s1810
          %1813 = dma.vmem_to_hbm [thread:$0]  %s1811, 64, %s1808, %s1796
        $region120: #{tpu_custom_call.1} parent=87 // pred_fallthru
          _
      $region88: #{tpu_custom_call.1} parent=5 // pred_fallthru
        _
      %p1814 = scmp.le.s32.totalorder 2, %s31
      // Predicated region
      $region121: #{tpu_custom_call.1} parent=5 // pred_check
        %p1815 = pneg %p1814
      $region122: #{tpu_custom_call.1} parent=5 // pred_check_branch
        %1817 = sbr.rel (%p1815) target = $region124
      $region123: #{tpu_custom_call.1} parent=5 // pred_region
        %s1818 = ssub.s32 %s31, 2
        // Predicated region
        $region125: #{tpu_custom_call.1} parent=123 // pred_check
          %p1819 = pneg %p446
        $region126: #{tpu_custom_call.1} parent=123 // pred_check_branch
          %1821 = sbr.rel (%p1819) target = $region128
        $region127: #{tpu_custom_call.1} parent=123 // pred_region
          %s1822 = sand.u32 %s431, 1
          %s1823 = scalar_lea.sflag [#allocation6], %s1822
          %s1824 = sand.u32 %s431, 1
          %s1825 = smul.addr %s1824, 4
          %s1826 = scalar_lea.vmem [#allocation12], %s1825
          %1827 = dma.done %s1823, 64
        $region128: #{tpu_custom_call.1} parent=123 // pred_fallthru
          _
      $region124: #{tpu_custom_call.1} parent=5 // pred_fallthru
        _
    $region6: #{tpu_custom_call.1} parent=1 // loop_footer
      %s35 = sadd.s32 1, %s31
    $region7: #{tpu_custom_call.1} parent=1 // loop_footer_branch
      %30 = sbr.rel target = $region3
    $region8: #{tpu_custom_call.1} parent=1 // loop_exit
      _
    %1828 = vsyncpa [#allocation5], 1
    %s1829 = scalar_lea.sflag [#allocation5], 1
    %1830 = vsyncpa %s1829, 1
    %1831 = vsyncpa [#allocation8], 1
    %1832 = vsyncpa [#allocation11], 1
    %1833 = vsyncpa [#allocation6], 1
    %s1834 = scalar_lea.sflag [#allocation6], 1
    %1835 = vsyncpa %s1834, 1

</llo_original>
